<compile_context>
chip_gen: v5e
topology: v5e:2x2
jax: 0.10.0
libtpu: 0.0.40
codegen_flags: <defaults>
</compile_context>

<pallas_src>
import jax
import jax.numpy as jnp
import numpy as np
from jax.experimental import pallas as pl
from jax.experimental.pallas import tpu as pltpu

EPS = 1e-5
LANES = 128


def _round_up(x, m):
    return ((x + m - 1) // m) * m


# ----------------------------------------------------------------------------
# Pallas kernel: conv (in-kernel tap accumulation) + folded-BN (+res) (+relu)
# ----------------------------------------------------------------------------
def _make_conv_kernel(taps, L, Wq, Ho, Wo, relu, has_res):
    """Builds the kernel for one (image, Cout-tile) grid cell.

    refs:
      x_ref   (1, P, Lp, Cin) bf16  flattened stride-phase images
      w_ref   (T, Cin, TC)    bf16  per-tap weights (BN scale folded in)
      b_ref   (1, TC)         f32   folded BN bias
      [res_ref (1, Ho, Wo, TC)]     residual (only when fused)
      o_ref   (1, Ho, Wo, TC)
      acc_ref (L, TC)         f32   VMEM accumulator scratch
    """

    def kernel(*refs):
        if has_res:
            x_ref, w_ref, b_ref, res_ref, o_ref, acc_ref = refs
        else:
            x_ref, w_ref, b_ref, o_ref, acc_ref = refs
            res_ref = None

        # Accumulate the k*k taps: each tap is a shifted contiguous slab of the
        # flattened phase image -> one (L, Cin) x (Cin, TC) MXU matmul.
        acc_ref[...] = jnp.zeros_like(acc_ref)
        for t, (p_idx, start) in enumerate(taps):
            xs = x_ref[0, p_idx, start:start + L, :]           # (L, Cin) bf16
            acc_ref[...] += jnp.dot(xs, w_ref[t],
                                    preferred_element_type=jnp.float32)

        bias = b_ref[...]                                      # (1, TC) f32, loaded once
        for i in range(Ho):
            # Row i of the output lives at flat offset i*Wq (junk cols >= Wo skipped).
            row = acc_ref[i * Wq:i * Wq + Wo, :] + bias        # (Wo, TC) f32
            if has_res:
                row = row + res_ref[0, i, :, :].astype(jnp.float32)
            if relu:
                row = jnp.maximum(row, 0.0)
            o_ref[0, i, :, :] = row.astype(o_ref.dtype)

    return kernel


# ----------------------------------------------------------------------------
# Wrapper: phase decomposition, BN folding, pallas_call plumbing
# ----------------------------------------------------------------------------
def _build_phases(xpad, ksize, stride, Ho, Wo):
    """Decompose a spatially padded NHWC tensor into stride-phase images,
    flatten spatially, and build the per-tap (phase_idx, flat_offset) table so
    a k x k / stride-s conv becomes k*k shifted-slab matmuls in the kernel."""
    N, Hp, Wp, C = xpad.shape
    phase_keys = sorted({(kh % stride, kw % stride)
                         for kh in range(ksize) for kw in range(ksize)})
    imgs = [xpad[:, p::stride, q::stride, :] for (p, q) in phase_keys]
    Hq = max(im.shape[1] for im in imgs)
    Wq = max(im.shape[2] for im in imgs)
    imgs = [jnp.pad(im, ((0, 0), (0, Hq - im.shape[1]),
                         (0, Wq - im.shape[2]), (0, 0))) for im in imgs]
    phases = jnp.stack(imgs, axis=1)                      # (N, P, Hq, Wq, C)
    flat = phases.reshape(N, len(phase_keys), Hq * Wq, C)

    L = Ho * Wq                                           # slab length per tap
    taps, max_end = [], 0
    for kh in range(ksize):
        for kw in range(ksize):
            p_idx = phase_keys.index((kh % stride, kw % stride))
            start = (kh // stride) * Wq + (kw // stride)
            taps.append((p_idx, start))
            max_end = max(max_end, start + L)
    if max_end > Hq * Wq:                                 # keep slab reads in-bounds
        flat = jnp.pad(flat, ((0, 0), (0, 0), (0, max_end - Hq * Wq), (0, 0)))
    return flat, taps, L, Wq


def conv_bn(x_nhwc, w_oihw, bn, *, stride, padding, relu,
            residual=None, out_dtype=jnp.bfloat16):
    """out = [relu]( conv(x, w) * bn_scale + bn_bias [+ residual] )

    x_nhwc:   (N, H, W, Cin) bf16; Cin may exceed the weight's input channels
              (extra channels must hold zeros, e.g. lane padding).
    w_oihw:   (O, I, k, k) PyTorch-layout conv weight, I <= Cin, no bias.
    residual: (N, Ho, Wo, Coutp) or None.
    returns   (N, Ho, Wo, Coutp), Coutp = O rounded up to 128 lanes.
    """
    N, H, W, Cin = x_nhwc.shape
    O, I, KH, KW = w_oihw.shape
    assert KH == KW and I <= Cin
    ksize = KH
    Ho = (H + 2 * padding - ksize) // stride + 1
    Wo = (W + 2 * padding - ksize) // stride + 1
    Coutp = _round_up(O, LANES)
    TC = LANES

    xpad = x_nhwc
    if padding:
        xpad = jnp.pad(x_nhwc, ((0, 0), (padding, padding),
                                (padding, padding), (0, 0)))
    flat, taps, L, Wq = _build_phases(xpad, ksize, stride, Ho, Wo)
    P, Lp = flat.shape[1], flat.shape[2]
    T = len(taps)

    # Fold BN into weight (scale) + bias; pad channels; cast operands to bf16.
    scale = bn["gamma"] / jnp.sqrt(bn["var"] + EPS)                    # (O,)
    bias = bn["beta"] - bn["mean"] * scale                             # (O,)
    wm = jnp.transpose(w_oihw, (2, 3, 1, 0)).reshape(T, I, O)
    wm = wm * scale[None, None, :]
    wm = jnp.pad(wm, ((0, 0), (0, Cin - I), (0, Coutp - O))).astype(jnp.bfloat16)
    biasp = jnp.pad(bias, (0, Coutp - O)).reshape(1, Coutp).astype(jnp.float32)

    has_res = residual is not None
    kernel = _make_conv_kernel(taps, L, Wq, Ho, Wo, relu, has_res)

    in_specs = [
        pl.BlockSpec((1, P, Lp, Cin), lambda n, c: (n, 0, 0, 0)),   # phase images
        pl.BlockSpec((T, Cin, TC), lambda n, c: (0, 0, c)),         # weights
        pl.BlockSpec((1, TC), lambda n, c: (0, c)),                 # bias
    ]
    inputs = [flat, wm, biasp]
    if has_res:
        in_specs.append(pl.BlockSpec((1, Ho, Wo, TC), lambda n, c: (n, 0, 0, c)))
        inputs.append(residual)

    return pl.pallas_call(
        kernel,
        out_shape=jax.ShapeDtypeStruct((N, Ho, Wo, Coutp), out_dtype),
        grid_spec=pltpu.PrefetchScalarGridSpec(
            num_scalar_prefetch=0,
            grid=(N, Coutp // TC),
            in_specs=in_specs,
            out_specs=pl.BlockSpec((1, Ho, Wo, TC), lambda n, c: (n, 0, 0, c)),
            scratch_shapes=[pltpu.VMEM((L, TC), jnp.float32)],
        ),
        compiler_params=pltpu.CompilerParams(
            dimension_semantics=("parallel", "parallel")),
    )(*inputs)


# ----------------------------------------------------------------------------
# Parameters and block forward
# ----------------------------------------------------------------------------
def make_params(key, in_planes, planes, stride):
    ks = jax.random.split(key, 12)

    def bn_params(k):
        k1, k2, k3, k4 = jax.random.split(k, 4)
        return {
            "gamma": 1.0 + 0.1 * jax.random.normal(k1, (planes,), jnp.float32),
            "beta": 0.1 * jax.random.normal(k2, (planes,), jnp.float32),
            "mean": 0.1 * jax.random.normal(k3, (planes,), jnp.float32),
            "var": 1.0 + 0.1 * jnp.abs(jax.random.normal(k4, (planes,), jnp.float32)),
        }

    params = {
        "w1": 0.1 * jax.random.normal(ks[0], (planes, in_planes, 3, 3), jnp.float32),
        "bn1": bn_params(ks[1]),
        "w2": 0.1 * jax.random.normal(ks[2], (planes, planes, 3, 3), jnp.float32),
        "bn2": bn_params(ks[3]),
    }
    if stride != 1 or in_planes != planes:
        params["wsc"] = 0.1 * jax.random.normal(
            ks[4], (planes, in_planes, 1, 1), jnp.float32
        )
        params["bnsc"] = bn_params(ks[5])
    return params


def basic_block_forward(x_nchw, params, stride):
    x = jnp.transpose(x_nchw, (0, 2, 3, 1)).astype(jnp.bfloat16)   # NCHW -> NHWC bf16
    planes = params["w1"].shape[0]
    cin = x.shape[-1]

    # conv1(3x3, stride) + bn1 + relu   (bf16, lane-padded channels)
    out1 = conv_bn(x, params["w1"], params["bn1"], stride=stride, padding=1,
                   relu=True, out_dtype=jnp.bfloat16)

    # shortcut branch
    if stride != 1 or cin != planes:
        shortcut = conv_bn(x, params["wsc"], params["bnsc"], stride=stride,
                           padding=0, relu=False, out_dtype=jnp.bfloat16)
    else:
        coutp = _round_up(planes, LANES)
        shortcut = jnp.pad(x, ((0, 0), (0, 0), (0, 0), (0, coutp - cin)))

    # conv2(3x3, stride 1) + bn2 + residual add + relu, fused in one kernel
    out2 = conv_bn(out1, params["w2"], params["bn2"], stride=1, padding=1,
                   relu=True, residual=shortcut, out_dtype=jnp.float32)

    out2 = out2[..., :planes]                         # drop output-lane padding
    return jnp.transpose(out2, (0, 3, 1, 2))          # NHWC -> NCHW


# ----------------------------------------------------------------------------
# Plain-JAX f32 reference (for correctness check)
# ----------------------------------------------------------------------------
def reference_forward(x_nchw, params, stride):
    x = jnp.transpose(x_nchw, (0, 2, 3, 1))

    def conv(x, w_oihw, s, pad):
        w = jnp.transpose(w_oihw, (2, 3, 1, 0))
        return jax.lax.conv_general_dilated(
            x, w, (s, s), [(pad, pad), (pad, pad)],
            dimension_numbers=("NHWC", "HWIO", "NHWC"),
        )

    def bn(y, p):
        return (y - p["mean"]) / jnp.sqrt(p["var"] + EPS) * p["gamma"] + p["beta"]

    out = jax.nn.relu(bn(conv(x, params["w1"], stride, 1), params["bn1"]))
    out = bn(conv(out, params["w2"], 1, 1), params["bn2"])
    if stride != 1 or x.shape[-1] != params["w1"].shape[0]:
        sc = bn(conv(x, params["wsc"], stride, 0), params["bnsc"])
    else:
        sc = x
    return jnp.transpose(jax.nn.relu(out + sc), (0, 3, 1, 2))


# ----------------------------------------------------------------------------
if __name__ == "__main__":
    in_planes, planes, stride = 4, 8, 2
    key = jax.random.PRNGKey(0)
    k_x, k_p = jax.random.split(key)

    x = jax.random.normal(k_x, (2, in_planes, 16, 16), jnp.float32)  # NCHW
    params = make_params(k_p, in_planes, planes, stride)

    out = jax.block_until_ready(basic_block_forward(x, params, stride))
    assert out.shape == (2, planes, 8, 8)

    ref = jax.block_until_ready(reference_forward(x, params, stride))
    # bf16 operands / bf16 intermediates -> slightly looser tolerance than f32.
    np.testing.assert_allclose(np.asarray(out, dtype=np.float32),
                               np.asarray(ref), rtol=5e-2, atol=5e-2)

    print("KERNEL_OK")
</pallas_src>

<mosaic_0001>
module attributes {stable_mosaic.version = 11 : i64} {
  func.func @kernel(%arg0: i32, %arg1: i32, %arg2: memref<1x4x82x4xbf16, #tpu.memory_space<vmem>>, %arg3: memref<9x4x128xbf16, #tpu.memory_space<vmem>>, %arg4: memref<1x128xf32, #tpu.memory_space<vmem>>, %arg5: memref<1x8x8x128xbf16, #tpu.memory_space<vmem>>, %arg6: memref<72x128xf32, #tpu.memory_space<vmem>>) attributes {dimension_semantics = [#tpu.dimension_semantics<parallel>, #tpu.dimension_semantics<parallel>], iteration_bounds = array<i64: 2, 1>, scalar_prefetch = 0 : i64, scratch_operands = 1 : i64, tpu.core_type = #tpu.core_type<tc>, window_params = [{transform_indices = @transform_0, window_bounds = array<i64: 1, 4, 82, 4>}, {transform_indices = @transform_1, window_bounds = array<i64: 9, 4, 128>}, {transform_indices = @transform_2, window_bounds = array<i64: 1, 128>}, {transform_indices = @transform_3, window_bounds = array<i64: 1, 8, 8, 128>}]} {
    %cst = arith.constant 0.000000e+00 : f32
    %0 = vector.broadcast %cst : f32 to vector<72x128xf32>
    %c0 = arith.constant 0 : index
    %c0_0 = arith.constant 0 : index
    %1 = vector.load %arg6[%c0, %c0_0] : memref<72x128xf32, #tpu.memory_space<vmem>>, vector<72x128xf32>
    tpu.vector_store %arg6[%c0, %c0_0], %0 {strides = array<i32>} : memref<72x128xf32, #tpu.memory_space<vmem>>, vector<72x128xf32>,
    %c0_1 = arith.constant 0 : index
    %c0_2 = arith.constant 0 : index
    %c0_3 = arith.constant 0 : index
    %c0_4 = arith.constant 0 : index
    %2 = vector.load %arg2[%c0_1, %c0_2, %c0_3, %c0_4] : memref<1x4x82x4xbf16, #tpu.memory_space<vmem>>, vector<1x1x72x4xbf16>
    %3 = vector.shape_cast %2 : vector<1x1x72x4xbf16> to vector<72x4xbf16>
    %c0_5 = arith.constant 0 : index
    %c0_6 = arith.constant 0 : index
    %4 = vector.load %arg6[%c0_5, %c0_6] : memref<72x128xf32, #tpu.memory_space<vmem>>, vector<72x128xf32>
    %c0_7 = arith.constant 0 : index
    %c0_8 = arith.constant 0 : index
    %c0_9 = arith.constant 0 : index
    %5 = vector.load %arg3[%c0_7, %c0_8, %c0_9] : memref<9x4x128xbf16, #tpu.memory_space<vmem>>, vector<1x4x128xbf16>
    %6 = vector.shape_cast %5 : vector<1x4x128xbf16> to vector<4x128xbf16>
    %cst_10 = arith.constant dense<0.000000e+00> : vector<72x128xf32>
    %7 = tpu.matmul %3, %6, %cst_10 {dimension_numbers = #tpu.dot_dimension_numbers<[1], [0], [0], [1], [0, 0, 1, 1], [], []>} : vector<72x4xbf16>, vector<4x128xbf16>, vector<72x128xf32> -> vector<72x128xf32>
    %8 = arith.addf %4, %7 : vector<72x128xf32>
    %c0_11 = arith.constant 0 : index
    %c0_12 = arith.constant 0 : index
    %9 = vector.load %arg6[%c0_11, %c0_12] : memref<72x128xf32, #tpu.memory_space<vmem>>, vector<72x128xf32>
    tpu.vector_store %arg6[%c0_11, %c0_12], %8 {strides = array<i32>} : memref<72x128xf32, #tpu.memory_space<vmem>>, vector<72x128xf32>,
    %c0_13 = arith.constant 0 : index
    %c1 = arith.constant 1 : index
    %c0_14 = arith.constant 0 : index
    %c0_15 = arith.constant 0 : index
    %10 = vector.load %arg2[%c0_13, %c1, %c0_14, %c0_15] : memref<1x4x82x4xbf16, #tpu.memory_space<vmem>>, vector<1x1x72x4xbf16>
    %11 = vector.shape_cast %10 : vector<1x1x72x4xbf16> to vector<72x4xbf16>
    %c0_16 = arith.constant 0 : index
    %c0_17 = arith.constant 0 : index
    %12 = vector.load %arg6[%c0_16, %c0_17] : memref<72x128xf32, #tpu.memory_space<vmem>>, vector<72x128xf32>
    %c1_18 = arith.constant 1 : index
    %c0_19 = arith.constant 0 : index
    %c0_20 = arith.constant 0 : index
    %13 = vector.load %arg3[%c1_18, %c0_19, %c0_20] : memref<9x4x128xbf16, #tpu.memory_space<vmem>>, vector<1x4x128xbf16>
    %14 = vector.shape_cast %13 : vector<1x4x128xbf16> to vector<4x128xbf16>
    %cst_21 = arith.constant dense<0.000000e+00> : vector<72x128xf32>
    %15 = tpu.matmul %11, %14, %cst_21 {dimension_numbers = #tpu.dot_dimension_numbers<[1], [0], [0], [1], [0, 0, 1, 1], [], []>} : vector<72x4xbf16>, vector<4x128xbf16>, vector<72x128xf32> -> vector<72x128xf32>
    %16 = arith.addf %12, %15 : vector<72x128xf32>
    %c0_22 = arith.constant 0 : index
    %c0_23 = arith.constant 0 : index
    %17 = vector.load %arg6[%c0_22, %c0_23] : memref<72x128xf32, #tpu.memory_space<vmem>>, vector<72x128xf32>
    tpu.vector_store %arg6[%c0_22, %c0_23], %16 {strides = array<i32>} : memref<72x128xf32, #tpu.memory_space<vmem>>, vector<72x128xf32>,
    %c0_24 = arith.constant 0 : index
    %c0_25 = arith.constant 0 : index
    %c1_26 = arith.constant 1 : index
    %c0_27 = arith.constant 0 : index
    %18 = vector.load %arg2[%c0_24, %c0_25, %c1_26, %c0_27] : memref<1x4x82x4xbf16, #tpu.memory_space<vmem>>, vector<1x1x72x4xbf16>
    %19 = vector.shape_cast %18 : vector<1x1x72x4xbf16> to vector<72x4xbf16>
    %c0_28 = arith.constant 0 : index
    %c0_29 = arith.constant 0 : index
    %20 = vector.load %arg6[%c0_28, %c0_29] : memref<72x128xf32, #tpu.memory_space<vmem>>, vector<72x128xf32>
    %c2 = arith.constant 2 : index
    %c0_30 = arith.constant 0 : index
    %c0_31 = arith.constant 0 : index
    %21 = vector.load %arg3[%c2, %c0_30, %c0_31] : memref<9x4x128xbf16, #tpu.memory_space<vmem>>, vector<1x4x128xbf16>
    %22 = vector.shape_cast %21 : vector<1x4x128xbf16> to vector<4x128xbf16>
    %cst_32 = arith.constant dense<0.000000e+00> : vector<72x128xf32>
    %23 = tpu.matmul %19, %22, %cst_32 {dimension_numbers = #tpu.dot_dimension_numbers<[1], [0], [0], [1], [0, 0, 1, 1], [], []>} : vector<72x4xbf16>, vector<4x128xbf16>, vector<72x128xf32> -> vector<72x128xf32>
    %24 = arith.addf %20, %23 : vector<72x128xf32>
    %c0_33 = arith.constant 0 : index
    %c0_34 = arith.constant 0 : index
    %25 = vector.load %arg6[%c0_33, %c0_34] : memref<72x128xf32, #tpu.memory_space<vmem>>, vector<72x128xf32>
    tpu.vector_store %arg6[%c0_33, %c0_34], %24 {strides = array<i32>} : memref<72x128xf32, #tpu.memory_space<vmem>>, vector<72x128xf32>,
    %c0_35 = arith.constant 0 : index
    %c2_36 = arith.constant 2 : index
    %c0_37 = arith.constant 0 : index
    %c0_38 = arith.constant 0 : index
    %26 = vector.load %arg2[%c0_35, %c2_36, %c0_37, %c0_38] : memref<1x4x82x4xbf16, #tpu.memory_space<vmem>>, vector<1x1x72x4xbf16>
    %27 = vector.shape_cast %26 : vector<1x1x72x4xbf16> to vector<72x4xbf16>
    %c0_39 = arith.constant 0 : index
    %c0_40 = arith.constant 0 : index
    %28 = vector.load %arg6[%c0_39, %c0_40] : memref<72x128xf32, #tpu.memory_space<vmem>>, vector<72x128xf32>
    %c3 = arith.constant 3 : index
    %c0_41 = arith.constant 0 : index
    %c0_42 = arith.constant 0 : index
    %29 = vector.load %arg3[%c3, %c0_41, %c0_42] : memref<9x4x128xbf16, #tpu.memory_space<vmem>>, vector<1x4x128xbf16>
    %30 = vector.shape_cast %29 : vector<1x4x128xbf16> to vector<4x128xbf16>
    %cst_43 = arith.constant dense<0.000000e+00> : vector<72x128xf32>
    %31 = tpu.matmul %27, %30, %cst_43 {dimension_numbers = #tpu.dot_dimension_numbers<[1], [0], [0], [1], [0, 0, 1, 1], [], []>} : vector<72x4xbf16>, vector<4x128xbf16>, vector<72x128xf32> -> vector<72x128xf32>
    %32 = arith.addf %28, %31 : vector<72x128xf32>
    %c0_44 = arith.constant 0 : index
    %c0_45 = arith.constant 0 : index
    %33 = vector.load %arg6[%c0_44, %c0_45] : memref<72x128xf32, #tpu.memory_space<vmem>>, vector<72x128xf32>
    tpu.vector_store %arg6[%c0_44, %c0_45], %32 {strides = array<i32>} : memref<72x128xf32, #tpu.memory_space<vmem>>, vector<72x128xf32>,
    %c0_46 = arith.constant 0 : index
    %c3_47 = arith.constant 3 : index
    %c0_48 = arith.constant 0 : index
    %c0_49 = arith.constant 0 : index
    %34 = vector.load %arg2[%c0_46, %c3_47, %c0_48, %c0_49] : memref<1x4x82x4xbf16, #tpu.memory_space<vmem>>, vector<1x1x72x4xbf16>
    %35 = vector.shape_cast %34 : vector<1x1x72x4xbf16> to vector<72x4xbf16>
    %c0_50 = arith.constant 0 : index
    %c0_51 = arith.constant 0 : index
    %36 = vector.load %arg6[%c0_50, %c0_51] : memref<72x128xf32, #tpu.memory_space<vmem>>, vector<72x128xf32>
    %c4 = arith.constant 4 : index
    %c0_52 = arith.constant 0 : index
    %c0_53 = arith.constant 0 : index
    %37 = vector.load %arg3[%c4, %c0_52, %c0_53] : memref<9x4x128xbf16, #tpu.memory_space<vmem>>, vector<1x4x128xbf16>
    %38 = vector.shape_cast %37 : vector<1x4x128xbf16> to vector<4x128xbf16>
    %cst_54 = arith.constant dense<0.000000e+00> : vector<72x128xf32>
    %39 = tpu.matmul %35, %38, %cst_54 {dimension_numbers = #tpu.dot_dimension_numbers<[1], [0], [0], [1], [0, 0, 1, 1], [], []>} : vector<72x4xbf16>, vector<4x128xbf16>, vector<72x128xf32> -> vector<72x128xf32>
    %40 = arith.addf %36, %39 : vector<72x128xf32>
    %c0_55 = arith.constant 0 : index
    %c0_56 = arith.constant 0 : index
    %41 = vector.load %arg6[%c0_55, %c0_56] : memref<72x128xf32, #tpu.memory_space<vmem>>, vector<72x128xf32>
    tpu.vector_store %arg6[%c0_55, %c0_56], %40 {strides = array<i32>} : memref<72x128xf32, #tpu.memory_space<vmem>>, vector<72x128xf32>,
    %c0_57 = arith.constant 0 : index
    %c2_58 = arith.constant 2 : index
    %c1_59 = arith.constant 1 : index
    %c0_60 = arith.constant 0 : index
    %42 = vector.load %arg2[%c0_57, %c2_58, %c1_59, %c0_60] : memref<1x4x82x4xbf16, #tpu.memory_space<vmem>>, vector<1x1x72x4xbf16>
    %43 = vector.shape_cast %42 : vector<1x1x72x4xbf16> to vector<72x4xbf16>
    %c0_61 = arith.constant 0 : index
    %c0_62 = arith.constant 0 : index
    %44 = vector.load %arg6[%c0_61, %c0_62] : memref<72x128xf32, #tpu.memory_space<vmem>>, vector<72x128xf32>
    %c5 = arith.constant 5 : index
    %c0_63 = arith.constant 0 : index
    %c0_64 = arith.constant 0 : index
    %45 = vector.load %arg3[%c5, %c0_63, %c0_64] : memref<9x4x128xbf16, #tpu.memory_space<vmem>>, vector<1x4x128xbf16>
    %46 = vector.shape_cast %45 : vector<1x4x128xbf16> to vector<4x128xbf16>
    %cst_65 = arith.constant dense<0.000000e+00> : vector<72x128xf32>
    %47 = tpu.matmul %43, %46, %cst_65 {dimension_numbers = #tpu.dot_dimension_numbers<[1], [0], [0], [1], [0, 0, 1, 1], [], []>} : vector<72x4xbf16>, vector<4x128xbf16>, vector<72x128xf32> -> vector<72x128xf32>
    %48 = arith.addf %44, %47 : vector<72x128xf32>
    %c0_66 = arith.constant 0 : index
    %c0_67 = arith.constant 0 : index
    %49 = vector.load %arg6[%c0_66, %c0_67] : memref<72x128xf32, #tpu.memory_space<vmem>>, vector<72x128xf32>
    tpu.vector_store %arg6[%c0_66, %c0_67], %48 {strides = array<i32>} : memref<72x128xf32, #tpu.memory_space<vmem>>, vector<72x128xf32>,
    %c0_68 = arith.constant 0 : index
    %c0_69 = arith.constant 0 : index
    %c9 = arith.constant 9 : index
    %c0_70 = arith.constant 0 : index
    %50 = vector.load %arg2[%c0_68, %c0_69, %c9, %c0_70] : memref<1x4x82x4xbf16, #tpu.memory_space<vmem>>, vector<1x1x72x4xbf16>
    %51 = vector.shape_cast %50 : vector<1x1x72x4xbf16> to vector<72x4xbf16>
    %c0_71 = arith.constant 0 : index
    %c0_72 = arith.constant 0 : index
    %52 = vector.load %arg6[%c0_71, %c0_72] : memref<72x128xf32, #tpu.memory_space<vmem>>, vector<72x128xf32>
    %c6 = arith.constant 6 : index
    %c0_73 = arith.constant 0 : index
    %c0_74 = arith.constant 0 : index
    %53 = vector.load %arg3[%c6, %c0_73, %c0_74] : memref<9x4x128xbf16, #tpu.memory_space<vmem>>, vector<1x4x128xbf16>
    %54 = vector.shape_cast %53 : vector<1x4x128xbf16> to vector<4x128xbf16>
    %cst_75 = arith.constant dense<0.000000e+00> : vector<72x128xf32>
    %55 = tpu.matmul %51, %54, %cst_75 {dimension_numbers = #tpu.dot_dimension_numbers<[1], [0], [0], [1], [0, 0, 1, 1], [], []>} : vector<72x4xbf16>, vector<4x128xbf16>, vector<72x128xf32> -> vector<72x128xf32>
    %56 = arith.addf %52, %55 : vector<72x128xf32>
    %c0_76 = arith.constant 0 : index
    %c0_77 = arith.constant 0 : index
    %57 = vector.load %arg6[%c0_76, %c0_77] : memref<72x128xf32, #tpu.memory_space<vmem>>, vector<72x128xf32>
    tpu.vector_store %arg6[%c0_76, %c0_77], %56 {strides = array<i32>} : memref<72x128xf32, #tpu.memory_space<vmem>>, vector<72x128xf32>,
    %c0_78 = arith.constant 0 : index
    %c1_79 = arith.constant 1 : index
    %c9_80 = arith.constant 9 : index
    %c0_81 = arith.constant 0 : index
    %58 = vector.load %arg2[%c0_78, %c1_79, %c9_80, %c0_81] : memref<1x4x82x4xbf16, #tpu.memory_space<vmem>>, vector<1x1x72x4xbf16>
    %59 = vector.shape_cast %58 : vector<1x1x72x4xbf16> to vector<72x4xbf16>
    %c0_82 = arith.constant 0 : index
    %c0_83 = arith.constant 0 : index
    %60 = vector.load %arg6[%c0_82, %c0_83] : memref<72x128xf32, #tpu.memory_space<vmem>>, vector<72x128xf32>
    %c7 = arith.constant 7 : index
    %c0_84 = arith.constant 0 : index
    %c0_85 = arith.constant 0 : index
    %61 = vector.load %arg3[%c7, %c0_84, %c0_85] : memref<9x4x128xbf16, #tpu.memory_space<vmem>>, vector<1x4x128xbf16>
    %62 = vector.shape_cast %61 : vector<1x4x128xbf16> to vector<4x128xbf16>
    %cst_86 = arith.constant dense<0.000000e+00> : vector<72x128xf32>
    %63 = tpu.matmul %59, %62, %cst_86 {dimension_numbers = #tpu.dot_dimension_numbers<[1], [0], [0], [1], [0, 0, 1, 1], [], []>} : vector<72x4xbf16>, vector<4x128xbf16>, vector<72x128xf32> -> vector<72x128xf32>
    %64 = arith.addf %60, %63 : vector<72x128xf32>
    %c0_87 = arith.constant 0 : index
    %c0_88 = arith.constant 0 : index
    %65 = vector.load %arg6[%c0_87, %c0_88] : memref<72x128xf32, #tpu.memory_space<vmem>>, vector<72x128xf32>
    tpu.vector_store %arg6[%c0_87, %c0_88], %64 {strides = array<i32>} : memref<72x128xf32, #tpu.memory_space<vmem>>, vector<72x128xf32>,
    %c0_89 = arith.constant 0 : index
    %c0_90 = arith.constant 0 : index
    %c10 = arith.constant 10 : index
    %c0_91 = arith.constant 0 : index
    %66 = vector.load %arg2[%c0_89, %c0_90, %c10, %c0_91] : memref<1x4x82x4xbf16, #tpu.memory_space<vmem>>, vector<1x1x72x4xbf16>
    %67 = vector.shape_cast %66 : vector<1x1x72x4xbf16> to vector<72x4xbf16>
    %c0_92 = arith.constant 0 : index
    %c0_93 = arith.constant 0 : index
    %68 = vector.load %arg6[%c0_92, %c0_93] : memref<72x128xf32, #tpu.memory_space<vmem>>, vector<72x128xf32>
    %c8 = arith.constant 8 : index
    %c0_94 = arith.constant 0 : index
    %c0_95 = arith.constant 0 : index
    %69 = vector.load %arg3[%c8, %c0_94, %c0_95] : memref<9x4x128xbf16, #tpu.memory_space<vmem>>, vector<1x4x128xbf16>
    %70 = vector.shape_cast %69 : vector<1x4x128xbf16> to vector<4x128xbf16>
    %cst_96 = arith.constant dense<0.000000e+00> : vector<72x128xf32>
    %71 = tpu.matmul %67, %70, %cst_96 {dimension_numbers = #tpu.dot_dimension_numbers<[1], [0], [0], [1], [0, 0, 1, 1], [], []>} : vector<72x4xbf16>, vector<4x128xbf16>, vector<72x128xf32> -> vector<72x128xf32>
    %72 = arith.addf %68, %71 : vector<72x128xf32>
    %c0_97 = arith.constant 0 : index
    %c0_98 = arith.constant 0 : index
    %73 = vector.load %arg6[%c0_97, %c0_98] : memref<72x128xf32, #tpu.memory_space<vmem>>, vector<72x128xf32>
    tpu.vector_store %arg6[%c0_97, %c0_98], %72 {strides = array<i32>} : memref<72x128xf32, #tpu.memory_space<vmem>>, vector<72x128xf32>,
    %c0_99 = arith.constant 0 : index
    %c0_100 = arith.constant 0 : index
    %74 = vector.load %arg4[%c0_99, %c0_100] : memref<1x128xf32, #tpu.memory_space<vmem>>, vector<1x128xf32>
    %c0_101 = arith.constant 0 : index
    %c0_102 = arith.constant 0 : index
    %75 = vector.load %arg6[%c0_101, %c0_102] : memref<72x128xf32, #tpu.memory_space<vmem>>, vector<8x128xf32>
    %76 = vector.broadcast %74 : vector<1x128xf32> to vector<8x128xf32>
    %77 = arith.addf %75, %76 : vector<8x128xf32>
    %cst_103 = arith.constant 0.000000e+00 : f32
    %78 = vector.broadcast %cst_103 : f32 to vector<8x128xf32>
    %79 = arith.maximumf %77, %78 : vector<8x128xf32>
    %80 = arith.truncf %79 : vector<8x128xf32> to vector<8x128xbf16>
    %c0_104 = arith.constant 0 : index
    %c0_105 = arith.constant 0 : index
    %c0_106 = arith.constant 0 : index
    %c0_107 = arith.constant 0 : index
    %81 = vector.load %arg5[%c0_104, %c0_105, %c0_106, %c0_107] : memref<1x8x8x128xbf16, #tpu.memory_space<vmem>>, vector<1x1x8x128xbf16>
    %82 = vector.shape_cast %81 : vector<1x1x8x128xbf16> to vector<8x128xbf16>
    %83 = vector.shape_cast %80 : vector<8x128xbf16> to vector<1x1x8x128xbf16>
    tpu.vector_store %arg5[%c0_104, %c0_105, %c0_106, %c0_107], %83 {strides = array<i32>} : memref<1x8x8x128xbf16, #tpu.memory_space<vmem>>, vector<1x1x8x128xbf16>,
    %c9_108 = arith.constant 9 : index
    %c0_109 = arith.constant 0 : index
    %84 = vector.load %arg6[%c9_108, %c0_109] : memref<72x128xf32, #tpu.memory_space<vmem>>, vector<8x128xf32>
    %85 = vector.broadcast %74 : vector<1x128xf32> to vector<8x128xf32>
    %86 = arith.addf %84, %85 : vector<8x128xf32>
    %cst_110 = arith.constant 0.000000e+00 : f32
    %87 = vector.broadcast %cst_110 : f32 to vector<8x128xf32>
    %88 = arith.maximumf %86, %87 : vector<8x128xf32>
    %89 = arith.truncf %88 : vector<8x128xf32> to vector<8x128xbf16>
    %c0_111 = arith.constant 0 : index
    %c1_112 = arith.constant 1 : index
    %c0_113 = arith.constant 0 : index
    %c0_114 = arith.constant 0 : index
    %90 = vector.load %arg5[%c0_111, %c1_112, %c0_113, %c0_114] : memref<1x8x8x128xbf16, #tpu.memory_space<vmem>>, vector<1x1x8x128xbf16>
    %91 = vector.shape_cast %90 : vector<1x1x8x128xbf16> to vector<8x128xbf16>
    %92 = vector.shape_cast %89 : vector<8x128xbf16> to vector<1x1x8x128xbf16>
    tpu.vector_store %arg5[%c0_111, %c1_112, %c0_113, %c0_114], %92 {strides = array<i32>} : memref<1x8x8x128xbf16, #tpu.memory_space<vmem>>, vector<1x1x8x128xbf16>,
    %c18 = arith.constant 18 : index
    %c0_115 = arith.constant 0 : index
    %93 = vector.load %arg6[%c18, %c0_115] : memref<72x128xf32, #tpu.memory_space<vmem>>, vector<8x128xf32>
    %94 = vector.broadcast %74 : vector<1x128xf32> to vector<8x128xf32>
    %95 = arith.addf %93, %94 : vector<8x128xf32>
    %cst_116 = arith.constant 0.000000e+00 : f32
    %96 = vector.broadcast %cst_116 : f32 to vector<8x128xf32>
    %97 = arith.maximumf %95, %96 : vector<8x128xf32>
    %98 = arith.truncf %97 : vector<8x128xf32> to vector<8x128xbf16>
    %c0_117 = arith.constant 0 : index
    %c2_118 = arith.constant 2 : index
    %c0_119 = arith.constant 0 : index
    %c0_120 = arith.constant 0 : index
    %99 = vector.load %arg5[%c0_117, %c2_118, %c0_119, %c0_120] : memref<1x8x8x128xbf16, #tpu.memory_space<vmem>>, vector<1x1x8x128xbf16>
    %100 = vector.shape_cast %99 : vector<1x1x8x128xbf16> to vector<8x128xbf16>
    %101 = vector.shape_cast %98 : vector<8x128xbf16> to vector<1x1x8x128xbf16>
    tpu.vector_store %arg5[%c0_117, %c2_118, %c0_119, %c0_120], %101 {strides = array<i32>} : memref<1x8x8x128xbf16, #tpu.memory_space<vmem>>, vector<1x1x8x128xbf16>,
    %c27 = arith.constant 27 : index
    %c0_121 = arith.constant 0 : index
    %102 = vector.load %arg6[%c27, %c0_121] : memref<72x128xf32, #tpu.memory_space<vmem>>, vector<8x128xf32>
    %103 = vector.broadcast %74 : vector<1x128xf32> to vector<8x128xf32>
    %104 = arith.addf %102, %103 : vector<8x128xf32>
    %cst_122 = arith.constant 0.000000e+00 : f32
    %105 = vector.broadcast %cst_122 : f32 to vector<8x128xf32>
    %106 = arith.maximumf %104, %105 : vector<8x128xf32>
    %107 = arith.truncf %106 : vector<8x128xf32> to vector<8x128xbf16>
    %c0_123 = arith.constant 0 : index
    %c3_124 = arith.constant 3 : index
    %c0_125 = arith.constant 0 : index
    %c0_126 = arith.constant 0 : index
    %108 = vector.load %arg5[%c0_123, %c3_124, %c0_125, %c0_126] : memref<1x8x8x128xbf16, #tpu.memory_space<vmem>>, vector<1x1x8x128xbf16>
    %109 = vector.shape_cast %108 : vector<1x1x8x128xbf16> to vector<8x128xbf16>
    %110 = vector.shape_cast %107 : vector<8x128xbf16> to vector<1x1x8x128xbf16>
    tpu.vector_store %arg5[%c0_123, %c3_124, %c0_125, %c0_126], %110 {strides = array<i32>} : memref<1x8x8x128xbf16, #tpu.memory_space<vmem>>, vector<1x1x8x128xbf16>,
    %c36 = arith.constant 36 : index
    %c0_127 = arith.constant 0 : index
    %111 = vector.load %arg6[%c36, %c0_127] : memref<72x128xf32, #tpu.memory_space<vmem>>, vector<8x128xf32>
    %112 = vector.broadcast %74 : vector<1x128xf32> to vector<8x128xf32>
    %113 = arith.addf %111, %112 : vector<8x128xf32>
    %cst_128 = arith.constant 0.000000e+00 : f32
    %114 = vector.broadcast %cst_128 : f32 to vector<8x128xf32>
    %115 = arith.maximumf %113, %114 : vector<8x128xf32>
    %116 = arith.truncf %115 : vector<8x128xf32> to vector<8x128xbf16>
    %c0_129 = arith.constant 0 : index
    %c4_130 = arith.constant 4 : index
    %c0_131 = arith.constant 0 : index
    %c0_132 = arith.constant 0 : index
    %117 = vector.load %arg5[%c0_129, %c4_130, %c0_131, %c0_132] : memref<1x8x8x128xbf16, #tpu.memory_space<vmem>>, vector<1x1x8x128xbf16>
    %118 = vector.shape_cast %117 : vector<1x1x8x128xbf16> to vector<8x128xbf16>
    %119 = vector.shape_cast %116 : vector<8x128xbf16> to vector<1x1x8x128xbf16>
    tpu.vector_store %arg5[%c0_129, %c4_130, %c0_131, %c0_132], %119 {strides = array<i32>} : memref<1x8x8x128xbf16, #tpu.memory_space<vmem>>, vector<1x1x8x128xbf16>,
    %c45 = arith.constant 45 : index
    %c0_133 = arith.constant 0 : index
    %120 = vector.load %arg6[%c45, %c0_133] : memref<72x128xf32, #tpu.memory_space<vmem>>, vector<8x128xf32>
    %121 = vector.broadcast %74 : vector<1x128xf32> to vector<8x128xf32>
    %122 = arith.addf %120, %121 : vector<8x128xf32>
    %cst_134 = arith.constant 0.000000e+00 : f32
    %123 = vector.broadcast %cst_134 : f32 to vector<8x128xf32>
    %124 = arith.maximumf %122, %123 : vector<8x128xf32>
    %125 = arith.truncf %124 : vector<8x128xf32> to vector<8x128xbf16>
    %c0_135 = arith.constant 0 : index
    %c5_136 = arith.constant 5 : index
    %c0_137 = arith.constant 0 : index
    %c0_138 = arith.constant 0 : index
    %126 = vector.load %arg5[%c0_135, %c5_136, %c0_137, %c0_138] : memref<1x8x8x128xbf16, #tpu.memory_space<vmem>>, vector<1x1x8x128xbf16>
    %127 = vector.shape_cast %126 : vector<1x1x8x128xbf16> to vector<8x128xbf16>
    %128 = vector.shape_cast %125 : vector<8x128xbf16> to vector<1x1x8x128xbf16>
    tpu.vector_store %arg5[%c0_135, %c5_136, %c0_137, %c0_138], %128 {strides = array<i32>} : memref<1x8x8x128xbf16, #tpu.memory_space<vmem>>, vector<1x1x8x128xbf16>,
    %c54 = arith.constant 54 : index
    %c0_139 = arith.constant 0 : index
    %129 = vector.load %arg6[%c54, %c0_139] : memref<72x128xf32, #tpu.memory_space<vmem>>, vector<8x128xf32>
    %130 = vector.broadcast %74 : vector<1x128xf32> to vector<8x128xf32>
    %131 = arith.addf %129, %130 : vector<8x128xf32>
    %cst_140 = arith.constant 0.000000e+00 : f32
    %132 = vector.broadcast %cst_140 : f32 to vector<8x128xf32>
    %133 = arith.maximumf %131, %132 : vector<8x128xf32>
    %134 = arith.truncf %133 : vector<8x128xf32> to vector<8x128xbf16>
    %c0_141 = arith.constant 0 : index
    %c6_142 = arith.constant 6 : index
    %c0_143 = arith.constant 0 : index
    %c0_144 = arith.constant 0 : index
    %135 = vector.load %arg5[%c0_141, %c6_142, %c0_143, %c0_144] : memref<1x8x8x128xbf16, #tpu.memory_space<vmem>>, vector<1x1x8x128xbf16>
    %136 = vector.shape_cast %135 : vector<1x1x8x128xbf16> to vector<8x128xbf16>
    %137 = vector.shape_cast %134 : vector<8x128xbf16> to vector<1x1x8x128xbf16>
    tpu.vector_store %arg5[%c0_141, %c6_142, %c0_143, %c0_144], %137 {strides = array<i32>} : memref<1x8x8x128xbf16, #tpu.memory_space<vmem>>, vector<1x1x8x128xbf16>,
    %c63 = arith.constant 63 : index
    %c0_145 = arith.constant 0 : index
    %138 = vector.load %arg6[%c63, %c0_145] : memref<72x128xf32, #tpu.memory_space<vmem>>, vector<8x128xf32>
    %139 = vector.broadcast %74 : vector<1x128xf32> to vector<8x128xf32>
    %140 = arith.addf %138, %139 : vector<8x128xf32>
    %cst_146 = arith.constant 0.000000e+00 : f32
    %141 = vector.broadcast %cst_146 : f32 to vector<8x128xf32>
    %142 = arith.maximumf %140, %141 : vector<8x128xf32>
    %143 = arith.truncf %142 : vector<8x128xf32> to vector<8x128xbf16>
    %c0_147 = arith.constant 0 : index
    %c7_148 = arith.constant 7 : index
    %c0_149 = arith.constant 0 : index
    %c0_150 = arith.constant 0 : index
    %144 = vector.load %arg5[%c0_147, %c7_148, %c0_149, %c0_150] : memref<1x8x8x128xbf16, #tpu.memory_space<vmem>>, vector<1x1x8x128xbf16>
    %145 = vector.shape_cast %144 : vector<1x1x8x128xbf16> to vector<8x128xbf16>
    %146 = vector.shape_cast %143 : vector<8x128xbf16> to vector<1x1x8x128xbf16>
    tpu.vector_store %arg5[%c0_147, %c7_148, %c0_149, %c0_150], %146 {strides = array<i32>} : memref<1x8x8x128xbf16, #tpu.memory_space<vmem>>, vector<1x1x8x128xbf16>,
    return
  }
  func.func @transform_0(%arg0: i32, %arg1: i32) -> (i32, i32, i32, i32) {
    %c0_i32 = arith.constant 0 : i32
    %c0_i32_0 = arith.constant 0 : i32
    %c0_i32_1 = arith.constant 0 : i32
    %c0_i32_2 = arith.constant 0 : i32
    return %arg0, %c0_i32, %c0_i32_0, %c0_i32_1 : i32, i32, i32, i32
  }
  func.func @transform_1(%arg0: i32, %arg1: i32) -> (i32, i32, i32) {
    %c0_i32 = arith.constant 0 : i32
    %c0_i32_0 = arith.constant 0 : i32
    %c0_i32_1 = arith.constant 0 : i32
    return %c0_i32, %c0_i32_0, %arg1 : i32, i32, i32
  }
  func.func @transform_2(%arg0: i32, %arg1: i32) -> (i32, i32) {
    %c0_i32 = arith.constant 0 : i32
    %c0_i32_0 = arith.constant 0 : i32
    return %c0_i32, %arg1 : i32, i32
  }
  func.func @transform_3(%arg0: i32, %arg1: i32) -> (i32, i32, i32, i32) {
    %c0_i32 = arith.constant 0 : i32
    %c0_i32_0 = arith.constant 0 : i32
    %c0_i32_1 = arith.constant 0 : i32
    return %arg0, %c0_i32, %c0_i32_0, %arg1 : i32, i32, i32, i32
  }
}

</mosaic_0001>

<llo_original>
// kernel: tpu_custom_call.1
$region0: #{tpu_custom_call.1}
  #allocation0 [shape = 'u32[]', space=smem, size = 0x4, offset = 0x4, fixed_abs, tag = 'smem constant byte address 0x4 - core index']
  #allocation1 [shape = 'u32[72,128]{1,0:T(1,128)}', space=vmem, size = 0x9000, scoped, tag = 'internal scratch']
  #allocation2 [shape = 'f32[72,128]{1,0:T(8,128)}', space=vmem, size = 0x9000, scoped, tag = 'scratch operand']
  %s0 = inlined_call_operand.vmem [shape: bf16[2,4,82,4], index: 0, kind: input, shape index: {}]
  %s1 = inlined_call_operand.vmem [shape: bf16[9,4,128], index: 1, kind: input, shape index: {}]
  %s2 = inlined_call_operand.vmem [shape: f32[1,128], index: 2, kind: input, shape index: {}]
  %s3 = inlined_call_operand.hbm [shape: bf16[2,8,8,128], index: 3, kind: output, shape index: {}]
  %s4 = sld [smem:[#allocation0]]
  $region45: #{tpu_custom_call.1} parent=0
    _
  %s6 = ssub.s32 1, %s4
  %s7 = scalar_select 0, %s6, %s4
  $region1: #{tpu_custom_call.1} parent=0
    #allocation3 [shape = 'u8[32768]{0}', space=vmem, size = 0x8000, scoped, tag = 'output window, operand 0']
    #allocation4 [shape = 's32[2]{0}', space=sflag, size = 0x8, scoped, tag = 'scoped memory for tpu_custom_call.1']
    %8 = vsyncpa [#allocation4], 0
    %s9 = scalar_lea.sflag [#allocation4], 1
    %10 = vsyncpa %s9, 0
    loop: start=0, step=1, limit=4
    $region2: #{tpu_custom_call.1} parent=1 // loop_pre_header
      _
    $region3: #{tpu_custom_call.1} parent=1 // loop_header
      %s12 = sphi 0, %s16
      %p13 = scmp.ge.s32.totalorder %s12, 4
      %s19 = sphi 0, %s31
      %s20 = sphi 0, %s27
      %s21 = sphi 0, %s19
      %s22 = sphi 0, %s20
      %s23 = sphi 0, %s21
      %s24 = sphi 0, %s22
      %s34 = sphi 0, %s36
      %s37 = sphi 0, %s34
      %s38 = sphi 0, %s37
      %s54 = sphi 0, %s38
      %s60 = sphi 0, %s62
      %s63 = sphi 0, %s60
      %s64 = sphi 0, %s63
      %s80 = sphi 0, %s64
      %s86 = sphi 0, %s88
      %s89 = sphi 0, %s86
      %s90 = sphi 0, %s89
      %s106 = sphi 0, %s90
      %s114 = sphi 0, %s116
      %s117 = sphi 0, %s114
      %s118 = sphi 0, %s117
      %s134 = sphi 0, %s118
    $region4: #{tpu_custom_call.1} parent=1 // loop_header_branch
      %15 = sbr.rel (%p13) target = $region8
    $region5: #{tpu_custom_call.1} parent=1 // loop_body
      %s17 = ssub.s32 %s12, 1
      %s18 = ssub.s32 %s12, 2
      %s25 = sadd.s32 1, %s20
      %p26 = scmp.ge.s32.totalorder %s25, 1
      %s27 = scalar_select %p26, 0, %s25
      %s28 = sadd.s32 1, %s19
      %s29 = scalar_select %p26, %s28, %s19
      %p30 = scmp.ge.s32.totalorder %s29, 2
      %s31 = scalar_select %p30, 0, %s29
      %s32 = ssub.s32 %s19, %s31
      %p33 = scmp.eq.s32.totalorder %s32, 0
      %s35 = sadd.s32 %s34, 1
      %s36 = scalar_select %p33, %s34, %s35
      %p39 = pneg %p33
      %p40 = scmp.eq.s32.totalorder %s12, 1
      %p41 = por %p39, %p40
      %p42 = scmp.ne.s32.totalorder %s34, %s37
      %p43 = scmp.eq.s32.totalorder %s12, 0
      %p44 = por %p42, %p43
      %p45 = scmp.ne.s32.totalorder %s34, %s37
      %p46 = scmp.eq.s32.totalorder %s17, 1
      %p47 = por %p45, %p46
      %p48 = scmp.ne.s32.totalorder %s37, %s38
      %p49 = scmp.eq.s32.totalorder %s17, 0
      %p50 = por %p48, %p49
      %p51 = scmp.ne.s32.totalorder %s37, %s38
      %p52 = scmp.eq.s32.totalorder %s18, 1
      %p53 = por %p51, %p52
      %p55 = scmp.ne.s32.totalorder %s38, %s54
      %p56 = scmp.eq.s32.totalorder %s18, 0
      %p57 = por %p55, %p56
      %s58 = ssub.s32 %s20, %s27
      %p59 = scmp.eq.s32.totalorder %s58, 0
      %s61 = sadd.s32 %s60, 1
      %s62 = scalar_select %p59, %s60, %s61
      %p65 = pneg %p59
      %p66 = scmp.eq.s32.totalorder %s12, 1
      %p67 = por %p65, %p66
      %p68 = scmp.ne.s32.totalorder %s60, %s63
      %p69 = scmp.eq.s32.totalorder %s12, 0
      %p70 = por %p68, %p69
      %p71 = scmp.ne.s32.totalorder %s60, %s63
      %p72 = scmp.eq.s32.totalorder %s17, 1
      %p73 = por %p71, %p72
      %p74 = scmp.ne.s32.totalorder %s63, %s64
      %p75 = scmp.eq.s32.totalorder %s17, 0
      %p76 = por %p74, %p75
      %p77 = scmp.ne.s32.totalorder %s63, %s64
      %p78 = scmp.eq.s32.totalorder %s18, 1
      %p79 = por %p77, %p78
      %p81 = scmp.ne.s32.totalorder %s64, %s80
      %p82 = scmp.eq.s32.totalorder %s18, 0
      %p83 = por %p81, %p82
      %s84 = ssub.s32 %s20, %s27
      %p85 = scmp.eq.s32.totalorder %s84, 0
      %s87 = sadd.s32 %s86, 1
      %s88 = scalar_select %p85, %s86, %s87
      %p91 = pneg %p85
      %p92 = scmp.eq.s32.totalorder %s12, 1
      %p93 = por %p91, %p92
      %p94 = scmp.ne.s32.totalorder %s86, %s89
      %p95 = scmp.eq.s32.totalorder %s12, 0
      %p96 = por %p94, %p95
      %p97 = scmp.ne.s32.totalorder %s86, %s89
      %p98 = scmp.eq.s32.totalorder %s17, 1
      %p99 = por %p97, %p98
      %p100 = scmp.ne.s32.totalorder %s89, %s90
      %p101 = scmp.eq.s32.totalorder %s17, 0
      %p102 = por %p100, %p101
      %p103 = scmp.ne.s32.totalorder %s89, %s90
      %p104 = scmp.eq.s32.totalorder %s18, 1
      %p105 = por %p103, %p104
      %p107 = scmp.ne.s32.totalorder %s90, %s106
      %p108 = scmp.eq.s32.totalorder %s18, 0
      %p109 = por %p107, %p108
      %s110 = ssub.s32 %s19, %s31
      %s111 = ssub.s32 %s20, %s27
      %s112 = sor.u32 %s110, %s111
      %p113 = scmp.eq.s32.totalorder %s112, 0
      %s115 = sadd.s32 %s114, 1
      %s116 = scalar_select %p113, %s114, %s115
      %p119 = pneg %p113
      %p120 = scmp.eq.s32.totalorder %s12, 1
      %p121 = por %p119, %p120
      %p122 = scmp.ne.s32.totalorder %s114, %s117
      %p123 = scmp.eq.s32.totalorder %s12, 0
      %p124 = por %p122, %p123
      %p125 = scmp.ne.s32.totalorder %s114, %s117
      %p126 = scmp.eq.s32.totalorder %s17, 1
      %p127 = por %p125, %p126
      %p128 = scmp.ne.s32.totalorder %s117, %s118
      %p129 = scmp.eq.s32.totalorder %s17, 0
      %p130 = por %p128, %p129
      %p131 = scmp.ne.s32.totalorder %s117, %s118
      %p132 = scmp.eq.s32.totalorder %s18, 1
      %p133 = por %p131, %p132
      %p135 = scmp.ne.s32.totalorder %s118, %s134
      %p136 = scmp.eq.s32.totalorder %s18, 0
      %p137 = por %p135, %p136
      %p138 = scmp.le.s32.totalorder 1, %s12
      %p139 = scmp.lt.s32.totalorder %s12, 3
      %p140 = pnand %p138, %p139
      %p141 = pneg %p140
      // Predicated region
      $region9: #{tpu_custom_call.1} parent=5 // pred_check
        _
      $region10: #{tpu_custom_call.1} parent=5 // pred_check_branch
        %143 = sbr.rel (%p140) target = $region12
      $region11: #{tpu_custom_call.1} parent=5 // pred_region
        %s144 = ssub.s32 %s12, 1
        // Predicated region
        $region13: #{tpu_custom_call.1} parent=11 // pred_check
          %p145 = pneg %p76
        $region14: #{tpu_custom_call.1} parent=11 // pred_check_branch
          %147 = sbr.rel (%p145) target = $region16
        $region15: #{tpu_custom_call.1} parent=11 // pred_region
          %p148 = scmp.lt.s32.totalorder %s22, 0
          %s149 = scalar_select %p148, %s22, 0
          %s150 = smul.addr %s149, 2
          %s151 = scalar_lea.vmem %s1, %s150
        $region16: #{tpu_custom_call.1} parent=11 // pred_fallthru
          _
        // Predicated region
        $region17: #{tpu_custom_call.1} parent=11 // pred_check
          %p152 = pneg %p102
        $region18: #{tpu_custom_call.1} parent=11 // pred_check_branch
          %154 = sbr.rel (%p152) target = $region20
        $region19: #{tpu_custom_call.1} parent=11 // pred_region
          %p155 = scmp.lt.s32.totalorder %s22, 0
          %s156 = scalar_select %p155, %s22, 0
          %s157 = scalar_lea.vmem %s2, %s156
        $region20: #{tpu_custom_call.1} parent=11 // pred_fallthru
          _
      $region12: #{tpu_custom_call.1} parent=5 // pred_fallthru
        _
      %p158 = scmp.lt.s32.totalorder %s12, 2
      // Predicated region
      $region21: #{tpu_custom_call.1} parent=5 // pred_check
        %p159 = pneg %p158
      $region22: #{tpu_custom_call.1} parent=5 // pred_check_branch
        %161 = sbr.rel (%p159) target = $region24
      $region23: #{tpu_custom_call.1} parent=5 // pred_region
        // Predicated region
        $region25: #{tpu_custom_call.1} parent=23 // pred_check
          %p162 = pneg %p44
        $region26: #{tpu_custom_call.1} parent=23 // pred_check_branch
          %164 = sbr.rel (%p162) target = $region28
        $region27: #{tpu_custom_call.1} parent=23 // pred_region
          %p165 = scmp.lt.s32.totalorder %s19, 1
          %s166 = scalar_select %p165, %s19, 1
          %s167 = smul.addr %s166, 44
          %s168 = smul.addr %s167, 4
          %s169 = scalar_lea.vmem %s0, %s168
        $region28: #{tpu_custom_call.1} parent=23 // pred_fallthru
          _
      $region24: #{tpu_custom_call.1} parent=5 // pred_fallthru
        _
      %p170 = scmp.le.s32.totalorder 1, %s12
      %p171 = scmp.lt.s32.totalorder %s12, 3
      %p172 = pnand %p170, %p171
      %p173 = pneg %p172
      // Predicated region
      $region29: #{tpu_custom_call.1} parent=5 // pred_check
        _
      $region30: #{tpu_custom_call.1} parent=5 // pred_check_branch
        %175 = sbr.rel (%p172) target = $region32
      $region31: #{tpu_custom_call.1} parent=5 // pred_region
        %s176 = ssub.s32 %s12, 1
        %p177 = scmp.lt.s32.totalorder %s21, 1
        %s178 = scalar_select %p177, %s21, 1
        %s179 = smul.addr %s178, 44
        %s180 = smul.addr %s179, 4
        %s181 = scalar_lea.vmem %s0, %s180
        %p182 = pneg %p50
        %p183 = pneg %p47
        %p184 = scmp.lt.s32.totalorder %s22, 0
        %s185 = scalar_select %p184, %s22, 0
        %s186 = smul.addr %s185, 2
        %s187 = scalar_lea.vmem %s1, %s186
        %p188 = pneg %p76
        %p189 = pneg %p73
        %p190 = scmp.lt.s32.totalorder %s22, 0
        %s191 = scalar_select %p190, %s22, 0
        %s192 = scalar_lea.vmem %s2, %s191
        %p193 = pneg %p102
        %p194 = pneg %p99
        %p195 = pneg %p130
        %p196 = pneg %p127
        %s197 = sand.u32 %s117, 1
        %s198 = scalar_lea.sflag [#allocation4], %s197
        %s199 = sand.u32 %s117, 1
        %s200 = smul.addr %s199, 32
        %s201 = scalar_lea.vmem [#allocation3], %s200
        %p202 = scmp.lt.s32.totalorder %s21, 1
        %s203 = scalar_select %p202, %s21, 1
        %s204 = smul.addr %s203, 44
        %s205 = smul.addr %s204, 4
        %s206 = scalar_lea.vmem %s0, %s205
        %p207 = scmp.lt.s32.totalorder %s22, 0
        %s208 = scalar_select %p207, %s22, 0
        %s209 = smul.addr %s208, 2
        %s210 = scalar_lea.vmem %s1, %s209
        %p211 = scmp.lt.s32.totalorder %s22, 0
        %s212 = scalar_select %p211, %s22, 0
        %s213 = scalar_lea.vmem %s2, %s212
        %215 = vst [vmem:[#allocation2] sm:$0xff] 0.0
        %216 = vst [vmem:[#allocation2 + $0x8] sm:$0xff] 0.0
        %217 = vst [vmem:[#allocation2 + $0x10] sm:$0xff] 0.0
        %218 = vst [vmem:[#allocation2 + $0x18] sm:$0xff] 0.0
        %219 = vst [vmem:[#allocation2 + $0x20] sm:$0xff] 0.0
        %220 = vst [vmem:[#allocation2 + $0x28] sm:$0xff] 0.0
        %221 = vst [vmem:[#allocation2 + $0x30] sm:$0xff] 0.0
        %222 = vst [vmem:[#allocation2 + $0x38] sm:$0xff] 0.0
        %223 = vst [vmem:[#allocation2 + $0x40] sm:$0xff] 0.0
        %v224 = vld [vmem:[%s206] sm:$0xf]
        %v225 = vld [vmem:[%s206 + $0x4] sm:$0xf]
        %v226 = vld [vmem:[%s206 + $0x8] sm:$0xf]
        %v227 = vld [vmem:[%s206 + $0xc] sm:$0xf]
        %v228 = vld [vmem:[%s206 + $0x10] sm:$0xf]
        %v229 = vld [vmem:[%s206 + $0x14] sm:$0xf]
        %v230 = vld [vmem:[%s206 + $0x18] sm:$0xf]
        %v231 = vld [vmem:[%s206 + $0x1c] sm:$0xf]
        %v232 = vld [vmem:[%s206 + $0x20] sm:$0xf]
        %v233 = vld [vmem:[#allocation2] sm:$0xff]
        %v234 = vld [vmem:[#allocation2 + $0x8] sm:$0xff]
        %v235 = vld [vmem:[#allocation2 + $0x10] sm:$0xff]
        %v236 = vld [vmem:[#allocation2 + $0x18] sm:$0xff]
        %v237 = vld [vmem:[#allocation2 + $0x20] sm:$0xff]
        %v238 = vld [vmem:[#allocation2 + $0x28] sm:$0xff]
        %v239 = vld [vmem:[#allocation2 + $0x30] sm:$0xff]
        %v240 = vld [vmem:[#allocation2 + $0x38] sm:$0xff]
        %v241 = vld [vmem:[#allocation2 + $0x40] sm:$0xff]
        %v242 = vld [vmem:[%s210] sm:$0x3]
        %v252 = vunpack.c.l.b16 %v224
        %v253 = vunpack.c.l.b16 %v225
        %v254 = vunpack.c.l.b16 %v226
        %v255 = vunpack.c.l.b16 %v227
        %v256 = vunpack.c.l.b16 %v228
        %v257 = vunpack.c.l.b16 %v229
        %v258 = vunpack.c.l.b16 %v230
        %v259 = vunpack.c.l.b16 %v231
        %v260 = vunpack.c.l.b16 %v232
        %v261 = vpack.c.b16 %v253, %v252
        %v262 = vpack.c.b16 %v255, %v254
        %v263 = vpack.c.b16 %v257, %v256
        %v264 = vpack.c.b16 %v259, %v258
        %v265 = vpack.c.b16 %v260, %v260
        %vm266 = vcmask 31744
        %v268 = vsel %vm266, %v261, 0
        %v271 = vsel %vm266, %v262, 0
        %v274 = vsel %vm266, %v263, 0
        %v277 = vsel %vm266, %v264, 0
        %v280 = vsel %vm266, %v265, 0
        %vm282 = vcmask 1041408
        %v284 = vsel %vm282, %v242, 0
        %286 = vmatpush.bf16.msra.mxu0 0
        %287 = vmatpush.bf16.msra.mxu0 0
        %288 = vmatpush.bf16.msra.mxu0 0
        %289 = vmatpush.bf16.msra.mxu0 0
        %290 = vmatpush.bf16.msra.mxu0 0
        %291 = vmatpush.bf16.msra.mxu0 0
        %292 = vmatpush.bf16.msra.mxu0 0
        %293 = vmatpush.bf16.msra.mxu0 %v284
        %294 = vmatmul.bf16.gmra.mxu0 %v268
        %v295 = vpop.f32.mrf.mxu0
        %v296 = vadd.f32 0.0, %v295
        %v297 = vpop.f32.mrf.mxu0
        %v298 = vadd.f32 0.0, %v297
        %299 = vmatmul.bf16.gmra.mxu0 %v271
        %v300 = vpop.f32.mrf.mxu0
        %v301 = vadd.f32 0.0, %v300
        %v302 = vpop.f32.mrf.mxu0
        %v303 = vadd.f32 0.0, %v302
        %304 = vmatmul.bf16.gmra.mxu0 %v274
        %v305 = vpop.f32.mrf.mxu0
        %v306 = vadd.f32 0.0, %v305
        %v307 = vpop.f32.mrf.mxu0
        %v308 = vadd.f32 0.0, %v307
        %309 = vmatmul.bf16.gmra.mxu0 %v277
        %v310 = vpop.f32.mrf.mxu0
        %v311 = vadd.f32 0.0, %v310
        %v312 = vpop.f32.mrf.mxu0
        %v313 = vadd.f32 0.0, %v312
        %314 = vmatmul.bf16.gmra.mxu0 %v280
        %v315 = vpop.f32.mrf.mxu0
        %v316 = vadd.f32 0.0, %v315
        %v317 = vpop.f32.mrf.mxu0
        %318 = vdwg.mxu0
        %v319 = vadd.f32 %v233, %v296
        %v320 = vadd.f32 %v234, %v298
        %v321 = vadd.f32 %v235, %v301
        %v322 = vadd.f32 %v236, %v303
        %v323 = vadd.f32 %v237, %v306
        %v324 = vadd.f32 %v238, %v308
        %v325 = vadd.f32 %v239, %v311
        %v326 = vadd.f32 %v240, %v313
        %v327 = vadd.f32 %v241, %v316
        %328 = vst [vmem:[#allocation2] sm:$0xff] %v319
        %329 = vst [vmem:[#allocation2 + $0x8] sm:$0xff] %v320
        %330 = vst [vmem:[#allocation2 + $0x10] sm:$0xff] %v321
        %331 = vst [vmem:[#allocation2 + $0x18] sm:$0xff] %v322
        %332 = vst [vmem:[#allocation2 + $0x20] sm:$0xff] %v323
        %333 = vst [vmem:[#allocation2 + $0x28] sm:$0xff] %v324
        %334 = vst [vmem:[#allocation2 + $0x30] sm:$0xff] %v325
        %335 = vst [vmem:[#allocation2 + $0x38] sm:$0xff] %v326
        %336 = vst [vmem:[#allocation2 + $0x40] sm:$0xff] %v327
        %s337 = scalar_lea.vmem %s206, 44
        %v338 = vld [vmem:[%s337] sm:$0xf]
        %v339 = vld [vmem:[%s337 + $0x4] sm:$0xf]
        %v340 = vld [vmem:[%s337 + $0x8] sm:$0xf]
        %v341 = vld [vmem:[%s337 + $0xc] sm:$0xf]
        %v342 = vld [vmem:[%s337 + $0x10] sm:$0xf]
        %v343 = vld [vmem:[%s337 + $0x14] sm:$0xf]
        %v344 = vld [vmem:[%s337 + $0x18] sm:$0xf]
        %v345 = vld [vmem:[%s337 + $0x1c] sm:$0xf]
        %v346 = vld [vmem:[%s337 + $0x20] sm:$0xf]
        %v347 = vld [vmem:[#allocation2] sm:$0xff]
        %v348 = vld [vmem:[#allocation2 + $0x8] sm:$0xff]
        %v349 = vld [vmem:[#allocation2 + $0x10] sm:$0xff]
        %v350 = vld [vmem:[#allocation2 + $0x18] sm:$0xff]
        %v351 = vld [vmem:[#allocation2 + $0x20] sm:$0xff]
        %v352 = vld [vmem:[#allocation2 + $0x28] sm:$0xff]
        %v353 = vld [vmem:[#allocation2 + $0x30] sm:$0xff]
        %v354 = vld [vmem:[#allocation2 + $0x38] sm:$0xff]
        %v355 = vld [vmem:[#allocation2 + $0x40] sm:$0xff]
        %s356 = scalar_lea.vmem %s210, 2
        %v357 = vld [vmem:[%s356] sm:$0x3]
        %v367 = vunpack.c.l.b16 %v338
        %v368 = vunpack.c.l.b16 %v339
        %v369 = vunpack.c.l.b16 %v340
        %v370 = vunpack.c.l.b16 %v341
        %v371 = vunpack.c.l.b16 %v342
        %v372 = vunpack.c.l.b16 %v343
        %v373 = vunpack.c.l.b16 %v344
        %v374 = vunpack.c.l.b16 %v345
        %v375 = vunpack.c.l.b16 %v346
        %v376 = vpack.c.b16 %v368, %v367
        %v377 = vpack.c.b16 %v370, %v369
        %v378 = vpack.c.b16 %v372, %v371
        %v379 = vpack.c.b16 %v374, %v373
        %v380 = vpack.c.b16 %v375, %v375
        %v382 = vsel %vm266, %v376, 0
        %v385 = vsel %vm266, %v377, 0
        %v388 = vsel %vm266, %v378, 0
        %v391 = vsel %vm266, %v379, 0
        %v394 = vsel %vm266, %v380, 0
        %v397 = vsel %vm282, %v357, 0
        %399 = vmatpush.bf16.msra.mxu0 0
        %400 = vmatpush.bf16.msra.mxu0 0
        %401 = vmatpush.bf16.msra.mxu0 0
        %402 = vmatpush.bf16.msra.mxu0 0
        %403 = vmatpush.bf16.msra.mxu0 0
        %404 = vmatpush.bf16.msra.mxu0 0
        %405 = vmatpush.bf16.msra.mxu0 0
        %406 = vmatpush.bf16.msra.mxu0 %v397
        %407 = vmatmul.bf16.gmra.mxu0 %v382
        %v408 = vpop.f32.mrf.mxu0
        %v409 = vadd.f32 0.0, %v408
        %v410 = vpop.f32.mrf.mxu0
        %v411 = vadd.f32 0.0, %v410
        %412 = vmatmul.bf16.gmra.mxu0 %v385
        %v413 = vpop.f32.mrf.mxu0
        %v414 = vadd.f32 0.0, %v413
        %v415 = vpop.f32.mrf.mxu0
        %v416 = vadd.f32 0.0, %v415
        %417 = vmatmul.bf16.gmra.mxu0 %v388
        %v418 = vpop.f32.mrf.mxu0
        %v419 = vadd.f32 0.0, %v418
        %v420 = vpop.f32.mrf.mxu0
        %v421 = vadd.f32 0.0, %v420
        %422 = vmatmul.bf16.gmra.mxu0 %v391
        %v423 = vpop.f32.mrf.mxu0
        %v424 = vadd.f32 0.0, %v423
        %v425 = vpop.f32.mrf.mxu0
        %v426 = vadd.f32 0.0, %v425
        %427 = vmatmul.bf16.gmra.mxu0 %v394
        %v428 = vpop.f32.mrf.mxu0
        %v429 = vadd.f32 0.0, %v428
        %v430 = vpop.f32.mrf.mxu0
        %431 = vdwg.mxu0
        %v432 = vadd.f32 %v347, %v409
        %v433 = vadd.f32 %v348, %v411
        %v434 = vadd.f32 %v349, %v414
        %v435 = vadd.f32 %v350, %v416
        %v436 = vadd.f32 %v351, %v419
        %v437 = vadd.f32 %v352, %v421
        %v438 = vadd.f32 %v353, %v424
        %v439 = vadd.f32 %v354, %v426
        %v440 = vadd.f32 %v355, %v429
        %441 = vst [vmem:[#allocation2] sm:$0xff] %v432
        %442 = vst [vmem:[#allocation2 + $0x8] sm:$0xff] %v433
        %443 = vst [vmem:[#allocation2 + $0x10] sm:$0xff] %v434
        %444 = vst [vmem:[#allocation2 + $0x18] sm:$0xff] %v435
        %445 = vst [vmem:[#allocation2 + $0x20] sm:$0xff] %v436
        %446 = vst [vmem:[#allocation2 + $0x28] sm:$0xff] %v437
        %447 = vst [vmem:[#allocation2 + $0x30] sm:$0xff] %v438
        %448 = vst [vmem:[#allocation2 + $0x38] sm:$0xff] %v439
        %449 = vst [vmem:[#allocation2 + $0x40] sm:$0xff] %v440
        %v450 = vld [vmem:[%s206] sm:$0xf]
        %v451 = vld [vmem:[%s206 + $0x4] sm:$0xf]
        %v452 = vld [vmem:[%s206 + $0x8] sm:$0xf]
        %v453 = vld [vmem:[%s206 + $0xc] sm:$0xf]
        %v454 = vld [vmem:[%s206 + $0x10] sm:$0xf]
        %v455 = vld [vmem:[%s206 + $0x14] sm:$0xf]
        %v456 = vld [vmem:[%s206 + $0x18] sm:$0xf]
        %v457 = vld [vmem:[%s206 + $0x1c] sm:$0xf]
        %v458 = vld [vmem:[%s206 + $0x20] sm:$0xf]
        %v459 = vld [vmem:[%s206 + $0x24] sm:$0x1]
        %v460 = vld [vmem:[#allocation2] sm:$0xff]
        %v461 = vld [vmem:[#allocation2 + $0x8] sm:$0xff]
        %v462 = vld [vmem:[#allocation2 + $0x10] sm:$0xff]
        %v463 = vld [vmem:[#allocation2 + $0x18] sm:$0xff]
        %v464 = vld [vmem:[#allocation2 + $0x20] sm:$0xff]
        %v465 = vld [vmem:[#allocation2 + $0x28] sm:$0xff]
        %v466 = vld [vmem:[#allocation2 + $0x30] sm:$0xff]
        %v467 = vld [vmem:[#allocation2 + $0x38] sm:$0xff]
        %v468 = vld [vmem:[#allocation2 + $0x40] sm:$0xff]
        %s469 = scalar_lea.vmem %s210, 4
        %v470 = vld [vmem:[%s469] sm:$0x3]
        %v481 = vunpack.c.l.b16 %v450
        %v482 = vunpack.c.l.b16 %v451
        %v483 = vunpack.c.l.b16 %v452
        %v484 = vunpack.c.l.b16 %v453
        %v485 = vunpack.c.l.b16 %v454
        %v486 = vunpack.c.l.b16 %v455
        %v487 = vunpack.c.l.b16 %v456
        %v488 = vunpack.c.l.b16 %v457
        %v489 = vunpack.c.l.b16 %v458
        %v490 = vunpack.c.l.b16 %v459
        %v491 = vpack.c.b16 %v482, %v481
        %v492 = vpack.c.b16 %v484, %v483
        %v493 = vpack.c.b16 %v486, %v485
        %v494 = vpack.c.b16 %v488, %v487
        %v495 = vpack.c.b16 %v490, %v489
        %vm496 = vsmask.f32 7424
        %v498 = vshrl.u32 %v491, 16
        %v500 = vshll.u32 %v491, 16
        %v502 = vrot.slane %v500, 1
        %v503 = vor.u32 %v498, %v502
        %v505 = vshll.u32 %v492, 16
        %v507 = vrot.slane %v505, 1
        %v508 = vsel %vm496, %v503, %v507
        %v509 = vshrl.u32 %v492, 16
        %v511 = vor.u32 %v509, %v507
        %v513 = vshll.u32 %v493, 16
        %v515 = vrot.slane %v513, 1
        %v516 = vsel %vm496, %v511, %v515
        %v517 = vshrl.u32 %v493, 16
        %v519 = vor.u32 %v517, %v515
        %v521 = vshll.u32 %v494, 16
        %v523 = vrot.slane %v521, 1
        %v524 = vsel %vm496, %v519, %v523
        %v525 = vshrl.u32 %v494, 16
        %v527 = vor.u32 %v525, %v523
        %v529 = vshll.u32 %v495, 16
        %v531 = vrot.slane %v529, 1
        %v532 = vsel %vm496, %v527, %v531
        %v533 = vshrl.u32 %v495, 16
        %v535 = vor.u32 %v533, %v531
        %v537 = vsel %vm266, %v508, 0
        %v540 = vsel %vm266, %v516, 0
        %v543 = vsel %vm266, %v524, 0
        %v546 = vsel %vm266, %v532, 0
        %v549 = vsel %vm266, %v535, 0
        %v552 = vsel %vm282, %v470, 0
        %554 = vmatpush.bf16.msra.mxu0 0
        %555 = vmatpush.bf16.msra.mxu0 0
        %556 = vmatpush.bf16.msra.mxu0 0
        %557 = vmatpush.bf16.msra.mxu0 0
        %558 = vmatpush.bf16.msra.mxu0 0
        %559 = vmatpush.bf16.msra.mxu0 0
        %560 = vmatpush.bf16.msra.mxu0 0
        %561 = vmatpush.bf16.msra.mxu0 %v552
        %562 = vmatmul.bf16.gmra.mxu0 %v537
        %v563 = vpop.f32.mrf.mxu0
        %v564 = vadd.f32 0.0, %v563
        %v565 = vpop.f32.mrf.mxu0
        %v566 = vadd.f32 0.0, %v565
        %567 = vmatmul.bf16.gmra.mxu0 %v540
        %v568 = vpop.f32.mrf.mxu0
        %v569 = vadd.f32 0.0, %v568
        %v570 = vpop.f32.mrf.mxu0
        %v571 = vadd.f32 0.0, %v570
        %572 = vmatmul.bf16.gmra.mxu0 %v543
        %v573 = vpop.f32.mrf.mxu0
        %v574 = vadd.f32 0.0, %v573
        %v575 = vpop.f32.mrf.mxu0
        %v576 = vadd.f32 0.0, %v575
        %577 = vmatmul.bf16.gmra.mxu0 %v546
        %v578 = vpop.f32.mrf.mxu0
        %v579 = vadd.f32 0.0, %v578
        %v580 = vpop.f32.mrf.mxu0
        %v581 = vadd.f32 0.0, %v580
        %582 = vmatmul.bf16.gmra.mxu0 %v549
        %v583 = vpop.f32.mrf.mxu0
        %v584 = vadd.f32 0.0, %v583
        %v585 = vpop.f32.mrf.mxu0
        %586 = vdwg.mxu0
        %v587 = vadd.f32 %v460, %v564
        %v588 = vadd.f32 %v461, %v566
        %v589 = vadd.f32 %v462, %v569
        %v590 = vadd.f32 %v463, %v571
        %v591 = vadd.f32 %v464, %v574
        %v592 = vadd.f32 %v465, %v576
        %v593 = vadd.f32 %v466, %v579
        %v594 = vadd.f32 %v467, %v581
        %v595 = vadd.f32 %v468, %v584
        %596 = vst [vmem:[#allocation2] sm:$0xff] %v587
        %597 = vst [vmem:[#allocation2 + $0x8] sm:$0xff] %v588
        %598 = vst [vmem:[#allocation2 + $0x10] sm:$0xff] %v589
        %599 = vst [vmem:[#allocation2 + $0x18] sm:$0xff] %v590
        %600 = vst [vmem:[#allocation2 + $0x20] sm:$0xff] %v591
        %601 = vst [vmem:[#allocation2 + $0x28] sm:$0xff] %v592
        %602 = vst [vmem:[#allocation2 + $0x30] sm:$0xff] %v593
        %603 = vst [vmem:[#allocation2 + $0x38] sm:$0xff] %v594
        %604 = vst [vmem:[#allocation2 + $0x40] sm:$0xff] %v595
        %s605 = scalar_lea.vmem %s206, 88
        %v606 = vld [vmem:[%s605] sm:$0xf]
        %v607 = vld [vmem:[%s605 + $0x4] sm:$0xf]
        %v608 = vld [vmem:[%s605 + $0x8] sm:$0xf]
        %v609 = vld [vmem:[%s605 + $0xc] sm:$0xf]
        %v610 = vld [vmem:[%s605 + $0x10] sm:$0xf]
        %v611 = vld [vmem:[%s605 + $0x14] sm:$0xf]
        %v612 = vld [vmem:[%s605 + $0x18] sm:$0xf]
        %v613 = vld [vmem:[%s605 + $0x1c] sm:$0xf]
        %v614 = vld [vmem:[%s605 + $0x20] sm:$0xf]
        %v615 = vld [vmem:[#allocation2] sm:$0xff]
        %v616 = vld [vmem:[#allocation2 + $0x8] sm:$0xff]
        %v617 = vld [vmem:[#allocation2 + $0x10] sm:$0xff]
        %v618 = vld [vmem:[#allocation2 + $0x18] sm:$0xff]
        %v619 = vld [vmem:[#allocation2 + $0x20] sm:$0xff]
        %v620 = vld [vmem:[#allocation2 + $0x28] sm:$0xff]
        %v621 = vld [vmem:[#allocation2 + $0x30] sm:$0xff]
        %v622 = vld [vmem:[#allocation2 + $0x38] sm:$0xff]
        %v623 = vld [vmem:[#allocation2 + $0x40] sm:$0xff]
        %s624 = scalar_lea.vmem %s210, 6
        %v625 = vld [vmem:[%s624] sm:$0x3]
        %v635 = vunpack.c.l.b16 %v606
        %v636 = vunpack.c.l.b16 %v607
        %v637 = vunpack.c.l.b16 %v608
        %v638 = vunpack.c.l.b16 %v609
        %v639 = vunpack.c.l.b16 %v610
        %v640 = vunpack.c.l.b16 %v611
        %v641 = vunpack.c.l.b16 %v612
        %v642 = vunpack.c.l.b16 %v613
        %v643 = vunpack.c.l.b16 %v614
        %v644 = vpack.c.b16 %v636, %v635
        %v645 = vpack.c.b16 %v638, %v637
        %v646 = vpack.c.b16 %v640, %v639
        %v647 = vpack.c.b16 %v642, %v641
        %v648 = vpack.c.b16 %v643, %v643
        %v650 = vsel %vm266, %v644, 0
        %v653 = vsel %vm266, %v645, 0
        %v656 = vsel %vm266, %v646, 0
        %v659 = vsel %vm266, %v647, 0
        %v662 = vsel %vm266, %v648, 0
        %v665 = vsel %vm282, %v625, 0
        %667 = vmatpush.bf16.msra.mxu0 0
        %668 = vmatpush.bf16.msra.mxu0 0
        %669 = vmatpush.bf16.msra.mxu0 0
        %670 = vmatpush.bf16.msra.mxu0 0
        %671 = vmatpush.bf16.msra.mxu0 0
        %672 = vmatpush.bf16.msra.mxu0 0
        %673 = vmatpush.bf16.msra.mxu0 0
        %674 = vmatpush.bf16.msra.mxu0 %v665
        %675 = vmatmul.bf16.gmra.mxu0 %v650
        %v676 = vpop.f32.mrf.mxu0
        %v677 = vadd.f32 0.0, %v676
        %v678 = vpop.f32.mrf.mxu0
        %v679 = vadd.f32 0.0, %v678
        %680 = vmatmul.bf16.gmra.mxu0 %v653
        %v681 = vpop.f32.mrf.mxu0
        %v682 = vadd.f32 0.0, %v681
        %v683 = vpop.f32.mrf.mxu0
        %v684 = vadd.f32 0.0, %v683
        %685 = vmatmul.bf16.gmra.mxu0 %v656
        %v686 = vpop.f32.mrf.mxu0
        %v687 = vadd.f32 0.0, %v686
        %v688 = vpop.f32.mrf.mxu0
        %v689 = vadd.f32 0.0, %v688
        %690 = vmatmul.bf16.gmra.mxu0 %v659
        %v691 = vpop.f32.mrf.mxu0
        %v692 = vadd.f32 0.0, %v691
        %v693 = vpop.f32.mrf.mxu0
        %v694 = vadd.f32 0.0, %v693
        %695 = vmatmul.bf16.gmra.mxu0 %v662
        %v696 = vpop.f32.mrf.mxu0
        %v697 = vadd.f32 0.0, %v696
        %v698 = vpop.f32.mrf.mxu0
        %699 = vdwg.mxu0
        %v700 = vadd.f32 %v615, %v677
        %v701 = vadd.f32 %v616, %v679
        %v702 = vadd.f32 %v617, %v682
        %v703 = vadd.f32 %v618, %v684
        %v704 = vadd.f32 %v619, %v687
        %v705 = vadd.f32 %v620, %v689
        %v706 = vadd.f32 %v621, %v692
        %v707 = vadd.f32 %v622, %v694
        %v708 = vadd.f32 %v623, %v697
        %709 = vst [vmem:[#allocation2] sm:$0xff] %v700
        %710 = vst [vmem:[#allocation2 + $0x8] sm:$0xff] %v701
        %711 = vst [vmem:[#allocation2 + $0x10] sm:$0xff] %v702
        %712 = vst [vmem:[#allocation2 + $0x18] sm:$0xff] %v703
        %713 = vst [vmem:[#allocation2 + $0x20] sm:$0xff] %v704
        %714 = vst [vmem:[#allocation2 + $0x28] sm:$0xff] %v705
        %715 = vst [vmem:[#allocation2 + $0x30] sm:$0xff] %v706
        %716 = vst [vmem:[#allocation2 + $0x38] sm:$0xff] %v707
        %717 = vst [vmem:[#allocation2 + $0x40] sm:$0xff] %v708
        %s718 = scalar_lea.vmem %s206, 132
        %v719 = vld [vmem:[%s718] sm:$0xf]
        %v720 = vld [vmem:[%s718 + $0x4] sm:$0xf]
        %v721 = vld [vmem:[%s718 + $0x8] sm:$0xf]
        %v722 = vld [vmem:[%s718 + $0xc] sm:$0xf]
        %v723 = vld [vmem:[%s718 + $0x10] sm:$0xf]
        %v724 = vld [vmem:[%s718 + $0x14] sm:$0xf]
        %v725 = vld [vmem:[%s718 + $0x18] sm:$0xf]
        %v726 = vld [vmem:[%s718 + $0x1c] sm:$0xf]
        %v727 = vld [vmem:[%s718 + $0x20] sm:$0xf]
        %v728 = vld [vmem:[#allocation2] sm:$0xff]
        %v729 = vld [vmem:[#allocation2 + $0x8] sm:$0xff]
        %v730 = vld [vmem:[#allocation2 + $0x10] sm:$0xff]
        %v731 = vld [vmem:[#allocation2 + $0x18] sm:$0xff]
        %v732 = vld [vmem:[#allocation2 + $0x20] sm:$0xff]
        %v733 = vld [vmem:[#allocation2 + $0x28] sm:$0xff]
        %v734 = vld [vmem:[#allocation2 + $0x30] sm:$0xff]
        %v735 = vld [vmem:[#allocation2 + $0x38] sm:$0xff]
        %v736 = vld [vmem:[#allocation2 + $0x40] sm:$0xff]
        %s737 = scalar_lea.vmem %s210, 8
        %v738 = vld [vmem:[%s737] sm:$0x3]
        %v748 = vunpack.c.l.b16 %v719
        %v749 = vunpack.c.l.b16 %v720
        %v750 = vunpack.c.l.b16 %v721
        %v751 = vunpack.c.l.b16 %v722
        %v752 = vunpack.c.l.b16 %v723
        %v753 = vunpack.c.l.b16 %v724
        %v754 = vunpack.c.l.b16 %v725
        %v755 = vunpack.c.l.b16 %v726
        %v756 = vunpack.c.l.b16 %v727
        %v757 = vpack.c.b16 %v749, %v748
        %v758 = vpack.c.b16 %v751, %v750
        %v759 = vpack.c.b16 %v753, %v752
        %v760 = vpack.c.b16 %v755, %v754
        %v761 = vpack.c.b16 %v756, %v756
        %v763 = vsel %vm266, %v757, 0
        %v766 = vsel %vm266, %v758, 0
        %v769 = vsel %vm266, %v759, 0
        %v772 = vsel %vm266, %v760, 0
        %v775 = vsel %vm266, %v761, 0
        %v778 = vsel %vm282, %v738, 0
        %780 = vmatpush.bf16.msra.mxu0 0
        %781 = vmatpush.bf16.msra.mxu0 0
        %782 = vmatpush.bf16.msra.mxu0 0
        %783 = vmatpush.bf16.msra.mxu0 0
        %784 = vmatpush.bf16.msra.mxu0 0
        %785 = vmatpush.bf16.msra.mxu0 0
        %786 = vmatpush.bf16.msra.mxu0 0
        %787 = vmatpush.bf16.msra.mxu0 %v778
        %788 = vmatmul.bf16.gmra.mxu0 %v763
        %v789 = vpop.f32.mrf.mxu0
        %v790 = vadd.f32 0.0, %v789
        %v791 = vpop.f32.mrf.mxu0
        %v792 = vadd.f32 0.0, %v791
        %793 = vmatmul.bf16.gmra.mxu0 %v766
        %v794 = vpop.f32.mrf.mxu0
        %v795 = vadd.f32 0.0, %v794
        %v796 = vpop.f32.mrf.mxu0
        %v797 = vadd.f32 0.0, %v796
        %798 = vmatmul.bf16.gmra.mxu0 %v769
        %v799 = vpop.f32.mrf.mxu0
        %v800 = vadd.f32 0.0, %v799
        %v801 = vpop.f32.mrf.mxu0
        %v802 = vadd.f32 0.0, %v801
        %803 = vmatmul.bf16.gmra.mxu0 %v772
        %v804 = vpop.f32.mrf.mxu0
        %v805 = vadd.f32 0.0, %v804
        %v806 = vpop.f32.mrf.mxu0
        %v807 = vadd.f32 0.0, %v806
        %808 = vmatmul.bf16.gmra.mxu0 %v775
        %v809 = vpop.f32.mrf.mxu0
        %v810 = vadd.f32 0.0, %v809
        %v811 = vpop.f32.mrf.mxu0
        %812 = vdwg.mxu0
        %v813 = vadd.f32 %v728, %v790
        %v814 = vadd.f32 %v729, %v792
        %v815 = vadd.f32 %v730, %v795
        %v816 = vadd.f32 %v731, %v797
        %v817 = vadd.f32 %v732, %v800
        %v818 = vadd.f32 %v733, %v802
        %v819 = vadd.f32 %v734, %v805
        %v820 = vadd.f32 %v735, %v807
        %v821 = vadd.f32 %v736, %v810
        %822 = vst [vmem:[#allocation2] sm:$0xff] %v813
        %823 = vst [vmem:[#allocation2 + $0x8] sm:$0xff] %v814
        %824 = vst [vmem:[#allocation2 + $0x10] sm:$0xff] %v815
        %825 = vst [vmem:[#allocation2 + $0x18] sm:$0xff] %v816
        %826 = vst [vmem:[#allocation2 + $0x20] sm:$0xff] %v817
        %827 = vst [vmem:[#allocation2 + $0x28] sm:$0xff] %v818
        %828 = vst [vmem:[#allocation2 + $0x30] sm:$0xff] %v819
        %829 = vst [vmem:[#allocation2 + $0x38] sm:$0xff] %v820
        %830 = vst [vmem:[#allocation2 + $0x40] sm:$0xff] %v821
        %v831 = vld [vmem:[%s605] sm:$0xf]
        %v832 = vld [vmem:[%s605 + $0x4] sm:$0xf]
        %v833 = vld [vmem:[%s605 + $0x8] sm:$0xf]
        %v834 = vld [vmem:[%s605 + $0xc] sm:$0xf]
        %v835 = vld [vmem:[%s605 + $0x10] sm:$0xf]
        %v836 = vld [vmem:[%s605 + $0x14] sm:$0xf]
        %v837 = vld [vmem:[%s605 + $0x18] sm:$0xf]
        %v838 = vld [vmem:[%s605 + $0x1c] sm:$0xf]
        %v839 = vld [vmem:[%s605 + $0x20] sm:$0xf]
        %v840 = vld [vmem:[%s605 + $0x24] sm:$0x1]
        %v841 = vld [vmem:[#allocation2] sm:$0xff]
        %v842 = vld [vmem:[#allocation2 + $0x8] sm:$0xff]
        %v843 = vld [vmem:[#allocation2 + $0x10] sm:$0xff]
        %v844 = vld [vmem:[#allocation2 + $0x18] sm:$0xff]
        %v845 = vld [vmem:[#allocation2 + $0x20] sm:$0xff]
        %v846 = vld [vmem:[#allocation2 + $0x28] sm:$0xff]
        %v847 = vld [vmem:[#allocation2 + $0x30] sm:$0xff]
        %v848 = vld [vmem:[#allocation2 + $0x38] sm:$0xff]
        %v849 = vld [vmem:[#allocation2 + $0x40] sm:$0xff]
        %s850 = scalar_lea.vmem %s210, 10
        %v851 = vld [vmem:[%s850] sm:$0x3]
        %v862 = vunpack.c.l.b16 %v831
        %v863 = vunpack.c.l.b16 %v832
        %v864 = vunpack.c.l.b16 %v833
        %v865 = vunpack.c.l.b16 %v834
        %v866 = vunpack.c.l.b16 %v835
        %v867 = vunpack.c.l.b16 %v836
        %v868 = vunpack.c.l.b16 %v837
        %v869 = vunpack.c.l.b16 %v838
        %v870 = vunpack.c.l.b16 %v839
        %v871 = vunpack.c.l.b16 %v840
        %v872 = vpack.c.b16 %v863, %v862
        %v873 = vpack.c.b16 %v865, %v864
        %v874 = vpack.c.b16 %v867, %v866
        %v875 = vpack.c.b16 %v869, %v868
        %v876 = vpack.c.b16 %v871, %v870
        %v878 = vshrl.u32 %v872, 16
        %v880 = vshll.u32 %v872, 16
        %v882 = vrot.slane %v880, 1
        %v883 = vor.u32 %v878, %v882
        %v885 = vshll.u32 %v873, 16
        %v887 = vrot.slane %v885, 1
        %v888 = vsel %vm496, %v883, %v887
        %v889 = vshrl.u32 %v873, 16
        %v891 = vor.u32 %v889, %v887
        %v893 = vshll.u32 %v874, 16
        %v895 = vrot.slane %v893, 1
        %v896 = vsel %vm496, %v891, %v895
        %v897 = vshrl.u32 %v874, 16
        %v899 = vor.u32 %v897, %v895
        %v901 = vshll.u32 %v875, 16
        %v903 = vrot.slane %v901, 1
        %v904 = vsel %vm496, %v899, %v903
        %v905 = vshrl.u32 %v875, 16
        %v907 = vor.u32 %v905, %v903
        %v909 = vshll.u32 %v876, 16
        %v911 = vrot.slane %v909, 1
        %v912 = vsel %vm496, %v907, %v911
        %v913 = vshrl.u32 %v876, 16
        %v915 = vor.u32 %v913, %v911
        %v917 = vsel %vm266, %v888, 0
        %v920 = vsel %vm266, %v896, 0
        %v923 = vsel %vm266, %v904, 0
        %v926 = vsel %vm266, %v912, 0
        %v929 = vsel %vm266, %v915, 0
        %v932 = vsel %vm282, %v851, 0
        %934 = vmatpush.bf16.msra.mxu0 0
        %935 = vmatpush.bf16.msra.mxu0 0
        %936 = vmatpush.bf16.msra.mxu0 0
        %937 = vmatpush.bf16.msra.mxu0 0
        %938 = vmatpush.bf16.msra.mxu0 0
        %939 = vmatpush.bf16.msra.mxu0 0
        %940 = vmatpush.bf16.msra.mxu0 0
        %941 = vmatpush.bf16.msra.mxu0 %v932
        %942 = vmatmul.bf16.gmra.mxu0 %v917
        %v943 = vpop.f32.mrf.mxu0
        %v944 = vadd.f32 0.0, %v943
        %v945 = vpop.f32.mrf.mxu0
        %v946 = vadd.f32 0.0, %v945
        %947 = vmatmul.bf16.gmra.mxu0 %v920
        %v948 = vpop.f32.mrf.mxu0
        %v949 = vadd.f32 0.0, %v948
        %v950 = vpop.f32.mrf.mxu0
        %v951 = vadd.f32 0.0, %v950
        %952 = vmatmul.bf16.gmra.mxu0 %v923
        %v953 = vpop.f32.mrf.mxu0
        %v954 = vadd.f32 0.0, %v953
        %v955 = vpop.f32.mrf.mxu0
        %v956 = vadd.f32 0.0, %v955
        %957 = vmatmul.bf16.gmra.mxu0 %v926
        %v958 = vpop.f32.mrf.mxu0
        %v959 = vadd.f32 0.0, %v958
        %v960 = vpop.f32.mrf.mxu0
        %v961 = vadd.f32 0.0, %v960
        %962 = vmatmul.bf16.gmra.mxu0 %v929
        %v963 = vpop.f32.mrf.mxu0
        %v964 = vadd.f32 0.0, %v963
        %v965 = vpop.f32.mrf.mxu0
        %966 = vdwg.mxu0
        %v967 = vadd.f32 %v841, %v944
        %v968 = vadd.f32 %v842, %v946
        %v969 = vadd.f32 %v843, %v949
        %v970 = vadd.f32 %v844, %v951
        %v971 = vadd.f32 %v845, %v954
        %v972 = vadd.f32 %v846, %v956
        %v973 = vadd.f32 %v847, %v959
        %v974 = vadd.f32 %v848, %v961
        %v975 = vadd.f32 %v849, %v964
        %976 = vst [vmem:[#allocation2] sm:$0xff] %v967
        %977 = vst [vmem:[#allocation2 + $0x8] sm:$0xff] %v968
        %978 = vst [vmem:[#allocation2 + $0x10] sm:$0xff] %v969
        %979 = vst [vmem:[#allocation2 + $0x18] sm:$0xff] %v970
        %980 = vst [vmem:[#allocation2 + $0x20] sm:$0xff] %v971
        %981 = vst [vmem:[#allocation2 + $0x28] sm:$0xff] %v972
        %982 = vst [vmem:[#allocation2 + $0x30] sm:$0xff] %v973
        %983 = vst [vmem:[#allocation2 + $0x38] sm:$0xff] %v974
        %984 = vst [vmem:[#allocation2 + $0x40] sm:$0xff] %v975
        %v985 = vld [vmem:[%s206 + $0x4] sm:$0xf]
        %v986 = vld [vmem:[%s206 + $0x8] sm:$0xf]
        %v987 = vld [vmem:[%s206 + $0xc] sm:$0xf]
        %v988 = vld [vmem:[%s206 + $0x10] sm:$0xf]
        %v989 = vld [vmem:[%s206 + $0x14] sm:$0xf]
        %v990 = vld [vmem:[%s206 + $0x18] sm:$0xf]
        %v991 = vld [vmem:[%s206 + $0x1c] sm:$0xf]
        %v992 = vld [vmem:[%s206 + $0x20] sm:$0xf]
        %v993 = vld [vmem:[%s206 + $0x24] sm:$0xf]
        %v994 = vld [vmem:[%s206 + $0x28] sm:$0x1]
        %v995 = vld [vmem:[#allocation2] sm:$0xff]
        %v996 = vld [vmem:[#allocation2 + $0x8] sm:$0xff]
        %v997 = vld [vmem:[#allocation2 + $0x10] sm:$0xff]
        %v998 = vld [vmem:[#allocation2 + $0x18] sm:$0xff]
        %v999 = vld [vmem:[#allocation2 + $0x20] sm:$0xff]
        %v1000 = vld [vmem:[#allocation2 + $0x28] sm:$0xff]
        %v1001 = vld [vmem:[#allocation2 + $0x30] sm:$0xff]
        %v1002 = vld [vmem:[#allocation2 + $0x38] sm:$0xff]
        %v1003 = vld [vmem:[#allocation2 + $0x40] sm:$0xff]
        %s1004 = scalar_lea.vmem %s210, 12
        %v1005 = vld [vmem:[%s1004] sm:$0x3]
        %v1016 = vunpack.c.l.b16 %v985
        %v1017 = vunpack.c.l.b16 %v986
        %v1018 = vunpack.c.l.b16 %v987
        %v1019 = vunpack.c.l.b16 %v988
        %v1020 = vunpack.c.l.b16 %v989
        %v1021 = vunpack.c.l.b16 %v990
        %v1022 = vunpack.c.l.b16 %v991
        %v1023 = vunpack.c.l.b16 %v992
        %v1024 = vunpack.c.l.b16 %v993
        %v1025 = vunpack.c.l.b16 %v994
        %v1026 = vpack.c.b16 %v1017, %v1016
        %v1027 = vpack.c.b16 %v1019, %v1018
        %v1028 = vpack.c.b16 %v1021, %v1020
        %v1029 = vpack.c.b16 %v1023, %v1022
        %v1030 = vpack.c.b16 %v1025, %v1024
        %v1032 = vshrl.u32 %v1026, 16
        %v1034 = vshll.u32 %v1026, 16
        %v1036 = vrot.slane %v1034, 1
        %v1037 = vor.u32 %v1032, %v1036
        %v1039 = vshll.u32 %v1027, 16
        %v1041 = vrot.slane %v1039, 1
        %v1042 = vsel %vm496, %v1037, %v1041
        %v1043 = vshrl.u32 %v1027, 16
        %v1045 = vor.u32 %v1043, %v1041
        %v1047 = vshll.u32 %v1028, 16
        %v1049 = vrot.slane %v1047, 1
        %v1050 = vsel %vm496, %v1045, %v1049
        %v1051 = vshrl.u32 %v1028, 16
        %v1053 = vor.u32 %v1051, %v1049
        %v1055 = vshll.u32 %v1029, 16
        %v1057 = vrot.slane %v1055, 1
        %v1058 = vsel %vm496, %v1053, %v1057
        %v1059 = vshrl.u32 %v1029, 16
        %v1061 = vor.u32 %v1059, %v1057
        %v1063 = vshll.u32 %v1030, 16
        %v1065 = vrot.slane %v1063, 1
        %v1066 = vsel %vm496, %v1061, %v1065
        %v1067 = vshrl.u32 %v1030, 16
        %v1069 = vor.u32 %v1067, %v1065
        %v1071 = vsel %vm266, %v1042, 0
        %v1074 = vsel %vm266, %v1050, 0
        %v1077 = vsel %vm266, %v1058, 0
        %v1080 = vsel %vm266, %v1066, 0
        %v1083 = vsel %vm266, %v1069, 0
        %v1086 = vsel %vm282, %v1005, 0
        %1088 = vmatpush.bf16.msra.mxu0 0
        %1089 = vmatpush.bf16.msra.mxu0 0
        %1090 = vmatpush.bf16.msra.mxu0 0
        %1091 = vmatpush.bf16.msra.mxu0 0
        %1092 = vmatpush.bf16.msra.mxu0 0
        %1093 = vmatpush.bf16.msra.mxu0 0
        %1094 = vmatpush.bf16.msra.mxu0 0
        %1095 = vmatpush.bf16.msra.mxu0 %v1086
        %1096 = vmatmul.bf16.gmra.mxu0 %v1071
        %v1097 = vpop.f32.mrf.mxu0
        %v1098 = vadd.f32 0.0, %v1097
        %v1099 = vpop.f32.mrf.mxu0
        %v1100 = vadd.f32 0.0, %v1099
        %1101 = vmatmul.bf16.gmra.mxu0 %v1074
        %v1102 = vpop.f32.mrf.mxu0
        %v1103 = vadd.f32 0.0, %v1102
        %v1104 = vpop.f32.mrf.mxu0
        %v1105 = vadd.f32 0.0, %v1104
        %1106 = vmatmul.bf16.gmra.mxu0 %v1077
        %v1107 = vpop.f32.mrf.mxu0
        %v1108 = vadd.f32 0.0, %v1107
        %v1109 = vpop.f32.mrf.mxu0
        %v1110 = vadd.f32 0.0, %v1109
        %1111 = vmatmul.bf16.gmra.mxu0 %v1080
        %v1112 = vpop.f32.mrf.mxu0
        %v1113 = vadd.f32 0.0, %v1112
        %v1114 = vpop.f32.mrf.mxu0
        %v1115 = vadd.f32 0.0, %v1114
        %1116 = vmatmul.bf16.gmra.mxu0 %v1083
        %v1117 = vpop.f32.mrf.mxu0
        %v1118 = vadd.f32 0.0, %v1117
        %v1119 = vpop.f32.mrf.mxu0
        %1120 = vdwg.mxu0
        %v1121 = vadd.f32 %v995, %v1098
        %v1122 = vadd.f32 %v996, %v1100
        %v1123 = vadd.f32 %v997, %v1103
        %v1124 = vadd.f32 %v998, %v1105
        %v1125 = vadd.f32 %v999, %v1108
        %v1126 = vadd.f32 %v1000, %v1110
        %v1127 = vadd.f32 %v1001, %v1113
        %v1128 = vadd.f32 %v1002, %v1115
        %v1129 = vadd.f32 %v1003, %v1118
        %1130 = vst [vmem:[#allocation2] sm:$0xff] %v1121
        %1131 = vst [vmem:[#allocation2 + $0x8] sm:$0xff] %v1122
        %1132 = vst [vmem:[#allocation2 + $0x10] sm:$0xff] %v1123
        %1133 = vst [vmem:[#allocation2 + $0x18] sm:$0xff] %v1124
        %1134 = vst [vmem:[#allocation2 + $0x20] sm:$0xff] %v1125
        %1135 = vst [vmem:[#allocation2 + $0x28] sm:$0xff] %v1126
        %1136 = vst [vmem:[#allocation2 + $0x30] sm:$0xff] %v1127
        %1137 = vst [vmem:[#allocation2 + $0x38] sm:$0xff] %v1128
        %1138 = vst [vmem:[#allocation2 + $0x40] sm:$0xff] %v1129
        %v1139 = vld [vmem:[%s337 + $0x4] sm:$0xf]
        %v1140 = vld [vmem:[%s337 + $0x8] sm:$0xf]
        %v1141 = vld [vmem:[%s337 + $0xc] sm:$0xf]
        %v1142 = vld [vmem:[%s337 + $0x10] sm:$0xf]
        %v1143 = vld [vmem:[%s337 + $0x14] sm:$0xf]
        %v1144 = vld [vmem:[%s337 + $0x18] sm:$0xf]
        %v1145 = vld [vmem:[%s337 + $0x1c] sm:$0xf]
        %v1146 = vld [vmem:[%s337 + $0x20] sm:$0xf]
        %v1147 = vld [vmem:[%s337 + $0x24] sm:$0xf]
        %v1148 = vld [vmem:[%s337 + $0x28] sm:$0x1]
        %v1149 = vld [vmem:[#allocation2] sm:$0xff]
        %v1150 = vld [vmem:[#allocation2 + $0x8] sm:$0xff]
        %v1151 = vld [vmem:[#allocation2 + $0x10] sm:$0xff]
        %v1152 = vld [vmem:[#allocation2 + $0x18] sm:$0xff]
        %v1153 = vld [vmem:[#allocation2 + $0x20] sm:$0xff]
        %v1154 = vld [vmem:[#allocation2 + $0x28] sm:$0xff]
        %v1155 = vld [vmem:[#allocation2 + $0x30] sm:$0xff]
        %v1156 = vld [vmem:[#allocation2 + $0x38] sm:$0xff]
        %v1157 = vld [vmem:[#allocation2 + $0x40] sm:$0xff]
        %s1158 = scalar_lea.vmem %s210, 14
        %v1159 = vld [vmem:[%s1158] sm:$0x3]
        %v1170 = vunpack.c.l.b16 %v1139
        %v1171 = vunpack.c.l.b16 %v1140
        %v1172 = vunpack.c.l.b16 %v1141
        %v1173 = vunpack.c.l.b16 %v1142
        %v1174 = vunpack.c.l.b16 %v1143
        %v1175 = vunpack.c.l.b16 %v1144
        %v1176 = vunpack.c.l.b16 %v1145
        %v1177 = vunpack.c.l.b16 %v1146
        %v1178 = vunpack.c.l.b16 %v1147
        %v1179 = vunpack.c.l.b16 %v1148
        %v1180 = vpack.c.b16 %v1171, %v1170
        %v1181 = vpack.c.b16 %v1173, %v1172
        %v1182 = vpack.c.b16 %v1175, %v1174
        %v1183 = vpack.c.b16 %v1177, %v1176
        %v1184 = vpack.c.b16 %v1179, %v1178
        %v1186 = vshrl.u32 %v1180, 16
        %v1188 = vshll.u32 %v1180, 16
        %v1190 = vrot.slane %v1188, 1
        %v1191 = vor.u32 %v1186, %v1190
        %v1193 = vshll.u32 %v1181, 16
        %v1195 = vrot.slane %v1193, 1
        %v1196 = vsel %vm496, %v1191, %v1195
        %v1197 = vshrl.u32 %v1181, 16
        %v1199 = vor.u32 %v1197, %v1195
        %v1201 = vshll.u32 %v1182, 16
        %v1203 = vrot.slane %v1201, 1
        %v1204 = vsel %vm496, %v1199, %v1203
        %v1205 = vshrl.u32 %v1182, 16
        %v1207 = vor.u32 %v1205, %v1203
        %v1209 = vshll.u32 %v1183, 16
        %v1211 = vrot.slane %v1209, 1
        %v1212 = vsel %vm496, %v1207, %v1211
        %v1213 = vshrl.u32 %v1183, 16
        %v1215 = vor.u32 %v1213, %v1211
        %v1217 = vshll.u32 %v1184, 16
        %v1219 = vrot.slane %v1217, 1
        %v1220 = vsel %vm496, %v1215, %v1219
        %v1221 = vshrl.u32 %v1184, 16
        %v1223 = vor.u32 %v1221, %v1219
        %v1225 = vsel %vm266, %v1196, 0
        %v1228 = vsel %vm266, %v1204, 0
        %v1231 = vsel %vm266, %v1212, 0
        %v1234 = vsel %vm266, %v1220, 0
        %v1237 = vsel %vm266, %v1223, 0
        %v1240 = vsel %vm282, %v1159, 0
        %1242 = vmatpush.bf16.msra.mxu0 0
        %1243 = vmatpush.bf16.msra.mxu0 0
        %1244 = vmatpush.bf16.msra.mxu0 0
        %1245 = vmatpush.bf16.msra.mxu0 0
        %1246 = vmatpush.bf16.msra.mxu0 0
        %1247 = vmatpush.bf16.msra.mxu0 0
        %1248 = vmatpush.bf16.msra.mxu0 0
        %1249 = vmatpush.bf16.msra.mxu0 %v1240
        %1250 = vmatmul.bf16.gmra.mxu0 %v1225
        %v1251 = vpop.f32.mrf.mxu0
        %v1252 = vadd.f32 0.0, %v1251
        %v1253 = vpop.f32.mrf.mxu0
        %v1254 = vadd.f32 0.0, %v1253
        %1255 = vmatmul.bf16.gmra.mxu0 %v1228
        %v1256 = vpop.f32.mrf.mxu0
        %v1257 = vadd.f32 0.0, %v1256
        %v1258 = vpop.f32.mrf.mxu0
        %v1259 = vadd.f32 0.0, %v1258
        %1260 = vmatmul.bf16.gmra.mxu0 %v1231
        %v1261 = vpop.f32.mrf.mxu0
        %v1262 = vadd.f32 0.0, %v1261
        %v1263 = vpop.f32.mrf.mxu0
        %v1264 = vadd.f32 0.0, %v1263
        %1265 = vmatmul.bf16.gmra.mxu0 %v1234
        %v1266 = vpop.f32.mrf.mxu0
        %v1267 = vadd.f32 0.0, %v1266
        %v1268 = vpop.f32.mrf.mxu0
        %v1269 = vadd.f32 0.0, %v1268
        %1270 = vmatmul.bf16.gmra.mxu0 %v1237
        %v1271 = vpop.f32.mrf.mxu0
        %v1272 = vadd.f32 0.0, %v1271
        %v1273 = vpop.f32.mrf.mxu0
        %1274 = vdwg.mxu0
        %v1275 = vadd.f32 %v1149, %v1252
        %v1276 = vadd.f32 %v1150, %v1254
        %v1277 = vadd.f32 %v1151, %v1257
        %v1278 = vadd.f32 %v1152, %v1259
        %v1279 = vadd.f32 %v1153, %v1262
        %v1280 = vadd.f32 %v1154, %v1264
        %v1281 = vadd.f32 %v1155, %v1267
        %v1282 = vadd.f32 %v1156, %v1269
        %v1283 = vadd.f32 %v1157, %v1272
        %1284 = vst [vmem:[#allocation2] sm:$0xff] %v1275
        %1285 = vst [vmem:[#allocation2 + $0x8] sm:$0xff] %v1276
        %1286 = vst [vmem:[#allocation2 + $0x10] sm:$0xff] %v1277
        %1287 = vst [vmem:[#allocation2 + $0x18] sm:$0xff] %v1278
        %1288 = vst [vmem:[#allocation2 + $0x20] sm:$0xff] %v1279
        %1289 = vst [vmem:[#allocation2 + $0x28] sm:$0xff] %v1280
        %1290 = vst [vmem:[#allocation2 + $0x30] sm:$0xff] %v1281
        %1291 = vst [vmem:[#allocation2 + $0x38] sm:$0xff] %v1282
        %1292 = vst [vmem:[#allocation2 + $0x40] sm:$0xff] %v1283
        %v1293 = vld [vmem:[%s206 + $0x4] sm:$0xe]
        %v1294 = vld [vmem:[%s206 + $0x8] sm:$0xf]
        %v1295 = vld [vmem:[%s206 + $0xc] sm:$0xf]
        %v1296 = vld [vmem:[%s206 + $0x10] sm:$0xf]
        %v1297 = vld [vmem:[%s206 + $0x14] sm:$0xf]
        %v1298 = vld [vmem:[%s206 + $0x18] sm:$0xf]
        %v1299 = vld [vmem:[%s206 + $0x1c] sm:$0xf]
        %v1300 = vld [vmem:[%s206 + $0x20] sm:$0xf]
        %v1301 = vld [vmem:[%s206 + $0x24] sm:$0xf]
        %v1302 = vld [vmem:[%s206 + $0x28] sm:$0x1]
        %v1303 = vld [vmem:[#allocation2] sm:$0xff]
        %v1304 = vld [vmem:[#allocation2 + $0x8] sm:$0xff]
        %v1305 = vld [vmem:[#allocation2 + $0x10] sm:$0xff]
        %v1306 = vld [vmem:[#allocation2 + $0x18] sm:$0xff]
        %v1307 = vld [vmem:[#allocation2 + $0x20] sm:$0xff]
        %v1308 = vld [vmem:[#allocation2 + $0x28] sm:$0xff]
        %v1309 = vld [vmem:[#allocation2 + $0x30] sm:$0xff]
        %v1310 = vld [vmem:[#allocation2 + $0x38] sm:$0xff]
        %v1311 = vld [vmem:[#allocation2 + $0x40] sm:$0xff]
        %s1312 = scalar_lea.vmem %s210, 16
        %v1313 = vld [vmem:[%s1312] sm:$0x3]
        %v1324 = vunpack.c.l.b16 %v1293
        %v1325 = vunpack.c.l.b16 %v1294
        %v1326 = vunpack.c.l.b16 %v1295
        %v1327 = vunpack.c.l.b16 %v1296
        %v1328 = vunpack.c.l.b16 %v1297
        %v1329 = vunpack.c.l.b16 %v1298
        %v1330 = vunpack.c.l.b16 %v1299
        %v1331 = vunpack.c.l.b16 %v1300
        %v1332 = vunpack.c.l.b16 %v1301
        %v1333 = vunpack.c.l.b16 %v1302
        %v1334 = vpack.c.b16 %v1325, %v1324
        %v1335 = vpack.c.b16 %v1327, %v1326
        %v1336 = vpack.c.b16 %v1329, %v1328
        %v1337 = vpack.c.b16 %v1331, %v1330
        %v1338 = vpack.c.b16 %v1333, %v1332
        %vm1339 = vcmask 1046528
        %v1340 = vrot.slane %v1334, 1
        %v1341 = vrot.slane %v1335, 1
        %v1342 = vsel %vm1339, %v1340, %v1341
        %v1343 = vrot.slane %v1336, 1
        %v1344 = vsel %vm1339, %v1341, %v1343
        %v1345 = vrot.slane %v1337, 1
        %v1346 = vsel %vm1339, %v1343, %v1345
        %v1347 = vrot.slane %v1338, 1
        %v1348 = vsel %vm1339, %v1345, %v1347
        %v1350 = vsel %vm266, %v1342, 0
        %v1353 = vsel %vm266, %v1344, 0
        %v1356 = vsel %vm266, %v1346, 0
        %v1359 = vsel %vm266, %v1348, 0
        %v1362 = vsel %vm266, %v1347, 0
        %v1365 = vsel %vm282, %v1313, 0
        %1367 = vmatpush.bf16.msra.mxu0 0
        %1368 = vmatpush.bf16.msra.mxu0 0
        %1369 = vmatpush.bf16.msra.mxu0 0
        %1370 = vmatpush.bf16.msra.mxu0 0
        %1371 = vmatpush.bf16.msra.mxu0 0
        %1372 = vmatpush.bf16.msra.mxu0 0
        %1373 = vmatpush.bf16.msra.mxu0 0
        %1374 = vmatpush.bf16.msra.mxu0 %v1365
        %1375 = vmatmul.bf16.gmra.mxu0 %v1350
        %v1376 = vpop.f32.mrf.mxu0
        %v1377 = vadd.f32 0.0, %v1376
        %v1378 = vpop.f32.mrf.mxu0
        %v1379 = vadd.f32 0.0, %v1378
        %1380 = vmatmul.bf16.gmra.mxu0 %v1353
        %v1381 = vpop.f32.mrf.mxu0
        %v1382 = vadd.f32 0.0, %v1381
        %v1383 = vpop.f32.mrf.mxu0
        %v1384 = vadd.f32 0.0, %v1383
        %1385 = vmatmul.bf16.gmra.mxu0 %v1356
        %v1386 = vpop.f32.mrf.mxu0
        %v1387 = vadd.f32 0.0, %v1386
        %v1388 = vpop.f32.mrf.mxu0
        %v1389 = vadd.f32 0.0, %v1388
        %1390 = vmatmul.bf16.gmra.mxu0 %v1359
        %v1391 = vpop.f32.mrf.mxu0
        %v1392 = vadd.f32 0.0, %v1391
        %v1393 = vpop.f32.mrf.mxu0
        %v1394 = vadd.f32 0.0, %v1393
        %1395 = vmatmul.bf16.gmra.mxu0 %v1362
        %v1396 = vpop.f32.mrf.mxu0
        %v1397 = vadd.f32 0.0, %v1396
        %v1398 = vpop.f32.mrf.mxu0
        %1399 = vdwg.mxu0
        %v1400 = vadd.f32 %v1303, %v1377
        %v1401 = vadd.f32 %v1304, %v1379
        %v1402 = vadd.f32 %v1305, %v1382
        %v1403 = vadd.f32 %v1306, %v1384
        %v1404 = vadd.f32 %v1307, %v1387
        %v1405 = vadd.f32 %v1308, %v1389
        %v1406 = vadd.f32 %v1309, %v1392
        %v1407 = vadd.f32 %v1310, %v1394
        %v1408 = vadd.f32 %v1311, %v1397
        %1409 = vst [vmem:[#allocation2] sm:$0xff] %v1400
        %1410 = vst [vmem:[#allocation2 + $0x8] sm:$0xff] %v1401
        %1411 = vst [vmem:[#allocation2 + $0x10] sm:$0xff] %v1402
        %1412 = vst [vmem:[#allocation2 + $0x18] sm:$0xff] %v1403
        %1413 = vst [vmem:[#allocation2 + $0x20] sm:$0xff] %v1404
        %1414 = vst [vmem:[#allocation2 + $0x28] sm:$0xff] %v1405
        %1415 = vst [vmem:[#allocation2 + $0x30] sm:$0xff] %v1406
        %1416 = vst [vmem:[#allocation2 + $0x38] sm:$0xff] %v1407
        %1417 = vst [vmem:[#allocation2 + $0x40] sm:$0xff] %v1408
        %v1418 = vld [vmem:[%s213] sm:$0x1]
        %v1419 = vld [vmem:[#allocation2] sm:$0xff]
        %v1421 = vperm.slane %v1418, 0
        %v1423 = vadd.f32 %v1419, %v1421
        %v1424 = vmax.f32 %v1423, 0.0
        %v1425 = vpack.c.bf16 %v1424, %v1424
        %1426 = vst [vmem:[%s201] sm:$0xf] %v1425
        %v1427 = vld [vmem:[#allocation2 + $0x9] sm:$0xff]
        %v1428 = vadd.f32 %v1427, %v1421
        %v1429 = vmax.f32 %v1428, 0.0
        %v1430 = vpack.c.bf16 %v1429, %v1429
        %s1431 = scalar_lea.vmem %s201, 4 [#allocation3]
        %1432 = vst [vmem:[%s1431] sm:$0xf] %v1430
        %v1433 = vld [vmem:[#allocation2 + $0x12] sm:$0xff]
        %v1434 = vadd.f32 %v1433, %v1421
        %v1435 = vmax.f32 %v1434, 0.0
        %v1436 = vpack.c.bf16 %v1435, %v1435
        %s1437 = scalar_lea.vmem %s201, 8 [#allocation3]
        %1438 = vst [vmem:[%s1437] sm:$0xf] %v1436
        %v1439 = vld [vmem:[#allocation2 + $0x1b] sm:$0xff]
        %v1440 = vadd.f32 %v1439, %v1421
        %v1441 = vmax.f32 %v1440, 0.0
        %v1442 = vpack.c.bf16 %v1441, %v1441
        %s1443 = scalar_lea.vmem %s201, 12 [#allocation3]
        %1444 = vst [vmem:[%s1443] sm:$0xf] %v1442
        %v1445 = vld [vmem:[#allocation2 + $0x24] sm:$0xff]
        %v1446 = vadd.f32 %v1445, %v1421
        %v1447 = vmax.f32 %v1446, 0.0
        %v1448 = vpack.c.bf16 %v1447, %v1447
        %s1449 = scalar_lea.vmem %s201, 16 [#allocation3]
        %1450 = vst [vmem:[%s1449] sm:$0xf] %v1448
        %v1451 = vld [vmem:[#allocation2 + $0x2d] sm:$0xff]
        %v1452 = vadd.f32 %v1451, %v1421
        %v1453 = vmax.f32 %v1452, 0.0
        %v1454 = vpack.c.bf16 %v1453, %v1453
        %s1455 = scalar_lea.vmem %s201, 20 [#allocation3]
        %1456 = vst [vmem:[%s1455] sm:$0xf] %v1454
        %v1457 = vld [vmem:[#allocation2 + $0x36] sm:$0xff]
        %v1458 = vadd.f32 %v1457, %v1421
        %v1459 = vmax.f32 %v1458, 0.0
        %v1460 = vpack.c.bf16 %v1459, %v1459
        %s1461 = scalar_lea.vmem %s201, 24 [#allocation3]
        %1462 = vst [vmem:[%s1461] sm:$0xf] %v1460
        %v1463 = vld [vmem:[#allocation2 + $0x3f] sm:$0xff]
        %v1464 = vadd.f32 %v1463, %v1421
        %v1465 = vmax.f32 %v1464, 0.0
        %v1466 = vpack.c.bf16 %v1465, %v1465
        %s1467 = scalar_lea.vmem %s201, 28 [#allocation3]
        %1468 = vst [vmem:[%s1467] sm:$0xf] %v1466
        %s1469 = sand.u32 %s117, 1
        %s1470 = scalar_lea.sflag [#allocation4], %s1469
        %s1471 = sand.u32 %s117, 1
        %s1472 = smul.addr %s1471, 32
        %s1473 = scalar_lea.vmem [#allocation3], %s1472
        // Predicated region
        $region33: #{tpu_custom_call.1} parent=31 // pred_check
          %p1474 = pneg %p127
        $region34: #{tpu_custom_call.1} parent=31 // pred_check_branch
          %1476 = sbr.rel (%p1474) target = $region36
        $region35: #{tpu_custom_call.1} parent=31 // pred_region
          %1478 = vsyncadd %s1470, 0
          %s1479 = smul.addr %s21, 8
          %s1480 = sadd.s32 %s22, %s1479
          %s1481 = smul.addr %s1480, 4
          %s1482 = scalar_lea.hbm %s3, %s1481
          %s1483 = sshll.u32 %s1473, 4
          %s1484 = int_to_ptr.vmem [resolvable:$true] %s1483
          %s1485 = sshll.u32 %s1482, 4
          %s1486 = int_to_ptr.hbm [resolvable:$true] %s1485
          %1491 = dma.vmem_to_hbm [thread:$0]  %s1484, 512, %s1486, %s1470, 64, 64, 4
        $region36: #{tpu_custom_call.1} parent=31 // pred_fallthru
          _
      $region32: #{tpu_custom_call.1} parent=5 // pred_fallthru
        _
      %p1492 = scmp.le.s32.totalorder 2, %s12
      // Predicated region
      $region37: #{tpu_custom_call.1} parent=5 // pred_check
        %p1493 = pneg %p1492
      $region38: #{tpu_custom_call.1} parent=5 // pred_check_branch
        %1495 = sbr.rel (%p1493) target = $region40
      $region39: #{tpu_custom_call.1} parent=5 // pred_region
        %s1496 = ssub.s32 %s12, 2
        // Predicated region
        $region41: #{tpu_custom_call.1} parent=39 // pred_check
          %p1497 = pneg %p133
        $region42: #{tpu_custom_call.1} parent=39 // pred_check_branch
          %1499 = sbr.rel (%p1497) target = $region44
        $region43: #{tpu_custom_call.1} parent=39 // pred_region
          %s1500 = sand.u32 %s118, 1
          %s1501 = scalar_lea.sflag [#allocation4], %s1500
          %s1502 = sand.u32 %s118, 1
          %s1503 = smul.addr %s1502, 32
          %s1504 = scalar_lea.vmem [#allocation3], %s1503
          %1506 = dma.done %s1501, 512
        $region44: #{tpu_custom_call.1} parent=39 // pred_fallthru
          _
      $region40: #{tpu_custom_call.1} parent=5 // pred_fallthru
        _
    $region6: #{tpu_custom_call.1} parent=1 // loop_footer
      %s16 = sadd.s32 1, %s12
    $region7: #{tpu_custom_call.1} parent=1 // loop_footer_branch
      %11 = sbr.rel target = $region3
    $region8: #{tpu_custom_call.1} parent=1 // loop_exit
      _
    %1507 = vsyncpa [#allocation4], 1
    %s1508 = scalar_lea.sflag [#allocation4], 1
    %1509 = vsyncpa %s1508, 1

</llo_original>
